<compile_context>
chip_gen: v7x
topology: tpu7x:2x2x1
jax: 0.10.0
libtpu: 0.0.40
codegen_flags: <defaults>
</compile_context>

<pallas_src>
import math

import jax
import jax.numpy as jnp
from jax.experimental import pallas as pl
from jax.experimental.pallas import tpu as pltpu

LN_EPS = 1e-5  # torch.nn.LayerNorm default eps


def _round8(n):
    return (n + 7) // 8 * 8


def _round128(n):
    return (n + 127) // 128 * 128


# ---------------------------------------------------------------------------
# In-kernel math helpers
# ---------------------------------------------------------------------------
def _erf(x):
    # Abramowitz & Stegun 7.1.26, max abs error ~1.5e-7.
    a1, a2, a3, a4, a5 = (0.254829592, -0.284496736, 1.421413741,
                          -1.453152027, 1.061405429)
    p = 0.3275911
    sgn = jnp.where(x >= 0.0, 1.0, -1.0)
    z = jnp.abs(x)
    t = 1.0 / (1.0 + p * z)
    poly = ((((a5 * t + a4) * t + a3) * t + a2) * t + a1) * t
    return sgn * (1.0 - poly * jnp.exp(-z * z))


def _gelu_exact(x):
    # nn.GELU() default (erf based): 0.5 * x * (1 + erf(x / sqrt(2)))
    return 0.5 * x * (1.0 + _erf(x * (1.0 / math.sqrt(2.0))))


def _layernorm(x, gamma, beta):
    # var = E[x^2] - mu^2 : the two last-axis reductions are independent
    # (no reduce -> subtract -> reduce serialization).
    mu = jnp.mean(x, axis=-1, keepdims=True)
    ms = jnp.mean(x * x, axis=-1, keepdims=True)
    var = ms - mu * mu
    return (x - mu) * jax.lax.rsqrt(var + LN_EPS) * gamma + beta


# ---------------------------------------------------------------------------
# One transformer layer (attention block + MLP block), traced inside the
# fused kernel.  `w_ref` is the packed per-layer weight buffer; all carve
# offsets are static Python ints baked in via `cfg`.
# ---------------------------------------------------------------------------
def _layer_forward(x, w_ref, cfg):
    d = cfg["d_in"]
    dout = cfg["d_out"]
    hd = cfg["hd"]
    H, Dh = cfg["heads"], cfg["head_size"]

    # ---- carve packed weights (static slices) ----
    a_g = w_ref[0:1, :d]
    a_b = w_ref[1:2, :d]
    bqkv = w_ref[2:3, :3 * hd]        # Q-part already scaled by 1/sqrt(Dh)
    bout = w_ref[3:4, :d]
    m_g = w_ref[4:5, :d]
    m_b = w_ref[5:6, :d]
    bmlp = w_ref[6:7, :dout]
    o1 = cfg["off_wqkv"]
    o2 = cfg["off_wout"]
    o3 = cfg["off_wmlp"]
    wqkv = w_ref[o1:o1 + d, :3 * hd]  # Q-columns already scaled by 1/sqrt(Dh)
    wout = w_ref[o2:o2 + hd, :d]
    wmlp = w_ref[o3:o3 + d, :dout]

    # ---- attention block + residual ----
    xn = _layernorm(x, a_g, a_b)
    # Single fused QKV projection (one lane-wide matmul).
    qkv = jnp.dot(xn, wqkv, preferred_element_type=jnp.float32) + bqkv  # (N, 3*hd)

    ctx = []
    for h in range(H):                                        # static, tiny H
        q = qkv[:, h * Dh:(h + 1) * Dh]
        k = qkv[:, hd + h * Dh: hd + (h + 1) * Dh]
        v = qkv[:, 2 * hd + h * Dh: 2 * hd + (h + 1) * Dh]
        s = jnp.einsum('qd,kd->qk', q, k,
                       preferred_element_type=jnp.float32)    # (N, N)
        s = s - jnp.max(s, axis=-1, keepdims=True)
        p = jnp.exp(s)
        l = jnp.sum(p, axis=-1, keepdims=True)
        r = pl.reciprocal(l, approx=True)                     # EUP slot
        r = r * (2.0 - l * r)                                 # 1 Newton step
        ctx.append(jnp.dot(p * r, v, preferred_element_type=jnp.float32))
    o = jnp.concatenate(ctx, axis=-1) if H > 1 else ctx[0]    # (N, hd)

    # Output projection: one matmul, head sum folded into the contraction.
    x = x + jnp.dot(o, wout, preferred_element_type=jnp.float32) + bout

    # ---- MLP block + residual ----
    xn = _layernorm(x, m_g, m_b)
    hpre = jnp.dot(xn, wmlp, preferred_element_type=jnp.float32) + bmlp
    y = _gelu_exact(hpre)                                     # (N, dout)
    if cfg["off_sel"] is None:
        return y + x                                          # plain residual
    o4 = cfg["off_sel"]
    sel = w_ref[o4:o4 + d, :dout]                             # nearest interp
    return y + jnp.dot(x, sel, preferred_element_type=jnp.float32)


def _make_kernel(cfgs):
    def kernel(x_ref, *refs):
        o_ref = refs[-1]
        w_refs = refs[:-1]
        x = x_ref[0].astype(jnp.float32)                      # (N, D0)
        for cfg, wref in zip(cfgs, w_refs):                   # static unroll
            x = _layer_forward(x, wref, cfg)
        o_ref[0] = x.astype(o_ref.dtype)
    return kernel


# ---------------------------------------------------------------------------
# Wrapper-side weight packing: one lane-dense (rows, >=128) buffer per layer.
# ---------------------------------------------------------------------------
def _pack_layer(layer):
    a, m = layer["attn"], layer["mlp"]
    H, Dh = layer["heads"], layer["head_size"]
    hd = H * Dh
    d_in = a["w_qkv"].shape[0]
    d_out = m["w"].shape[1]
    lane = _round128(max(d_in, d_out, 3 * hd))
    width_change = d_in != d_out

    # Fold the 1/sqrt(head_size) attention scale into W_q / b_q (constant
    # folding outside the kernel; removes the per-element scale at runtime).
    scale = 1.0 / math.sqrt(Dh)
    w_qkv = a["w_qkv"].at[:, :hd].multiply(scale)
    b_qkv = a["b_qkv"].at[:, :hd].multiply(scale)

    off_wqkv = 8                              # rows 0..7 = small vectors
    off_wout = off_wqkv + _round8(d_in)
    off_wmlp = off_wout + _round8(hd)
    off_sel = off_wmlp + _round8(d_in)
    rows = off_sel + (_round8(d_in) if width_change else 0)

    buf = jnp.zeros((rows, lane), jnp.float32)
    buf = buf.at[0, :d_in].set(a["ln_g"][0])
    buf = buf.at[1, :d_in].set(a["ln_b"][0])
    buf = buf.at[2, :3 * hd].set(b_qkv[0])
    buf = buf.at[3, :d_in].set(a["b_out"][0])
    buf = buf.at[4, :d_in].set(m["ln_g"][0])
    buf = buf.at[5, :d_in].set(m["ln_b"][0])
    buf = buf.at[6, :d_out].set(m["b"][0])
    buf = buf.at[off_wqkv:off_wqkv + d_in, :3 * hd].set(w_qkv)
    buf = buf.at[off_wout:off_wout + hd, :d_in].set(a["w_out"])
    buf = buf.at[off_wmlp:off_wmlp + d_in, :d_out].set(m["w"])
    if width_change:
        buf = buf.at[off_sel:off_sel + d_in, :d_out].set(m["sel"])

    cfg = dict(heads=H, head_size=Dh, hd=hd, d_in=d_in, d_out=d_out,
               off_wqkv=off_wqkv, off_wout=off_wout, off_wmlp=off_wmlp,
               off_sel=off_sel if width_change else None)
    return buf, cfg


def _weight_spec(shape):
    """Grid-invariant weight block; request single buffering if supported."""
    idx = lambda b: (0,) * len(shape)
    buffered = getattr(pl, "Buffered", None)
    if buffered is not None:
        try:
            return pl.BlockSpec(shape, idx, pipeline_mode=buffered(1))
        except (TypeError, ValueError):
            pass
    return pl.BlockSpec(shape, idx)


def _compiler_params():
    cp_cls = (getattr(pltpu, "CompilerParams", None)
              or getattr(pltpu, "TPUCompilerParams", None))
    if cp_cls is None:
        return None
    try:
        return cp_cls(dimension_semantics=("parallel",),
                      vmem_limit_bytes=32 * 1024 * 1024)
    except TypeError:
        return cp_cls(dimension_semantics=("parallel",))


def transformer_forward(x, params):
    B, N, D0 = x.shape
    packs, cfgs = [], []
    for layer in params["layers"]:
        buf, cfg = _pack_layer(layer)
        packs.append(buf)
        cfgs.append(cfg)
    d_last = cfgs[-1]["d_out"]

    kernel = _make_kernel(cfgs)
    in_specs = [pl.BlockSpec((1, N, D0), lambda b: (b, 0, 0))]   # activations
    for buf in packs:                                            # packed weights
        in_specs.append(_weight_spec(buf.shape))

    # TODO(synk): for large configs on v7x (64 MiB VMEM/TC) stream the per-layer
    # weight buffers with pltpu.emit_pipeline instead of holding all resident.
    return pl.pallas_call(
        kernel,
        out_shape=jax.ShapeDtypeStruct((B, N, d_last), x.dtype),
        grid=(B,),
        in_specs=in_specs,
        out_specs=pl.BlockSpec((1, N, d_last), lambda b: (b, 0, 0)),
        compiler_params=_compiler_params(),
    )(x, *packs)


# ---------------------------------------------------------------------------
# Parameter construction (deterministic, synthetic weights)
# ---------------------------------------------------------------------------
def init_transformer_params(key, layer_sizes, heads_list, head_sizes):
    layers = []
    for d_in, d_out, H, Dh in zip(layer_sizes[:-1], layer_sizes[1:],
                                  heads_list, head_sizes):
        key, k1, k2, k3, k4, k5, k6 = jax.random.split(key, 7)
        hd = H * Dh
        attn = dict(
            ln_g=jnp.ones((1, d_in), jnp.float32),
            ln_b=jnp.zeros((1, d_in), jnp.float32),
            w_qkv=jax.random.normal(k1, (d_in, 3 * hd), jnp.float32) / math.sqrt(d_in),
            b_qkv=0.01 * jax.random.normal(k2, (1, 3 * hd), jnp.float32),
            w_out=jax.random.normal(k3, (hd, d_in), jnp.float32) / math.sqrt(hd),
            b_out=0.01 * jax.random.normal(k4, (1, d_in), jnp.float32),
        )
        mlp = dict(
            ln_g=jnp.ones((1, d_in), jnp.float32),
            ln_b=jnp.zeros((1, d_in), jnp.float32),
            w=jax.random.normal(k5, (d_in, d_out), jnp.float32) / math.sqrt(d_in),
            b=0.01 * jax.random.normal(k6, (1, d_out), jnp.float32),
        )
        if d_in != d_out:
            # F.interpolate(..., size=d_out, mode='nearest') along the feature
            # axis: dst j reads src floor(j * d_in / d_out).  Stored as a
            # selection matrix (only for width-changing layers).
            src = (jnp.arange(d_out) * d_in) // d_out
            mlp["sel"] = jnp.zeros((d_in, d_out), jnp.float32).at[
                src, jnp.arange(d_out)].set(1.0)
        layers.append(dict(attn=attn, mlp=mlp, heads=H, head_size=Dh))
    return dict(layers=layers)


# ---------------------------------------------------------------------------
# Pure-JAX reference (same math, no Pallas) for a correctness check
# ---------------------------------------------------------------------------
def reference_forward(x, params):
    def ln(t, g, b):
        mu = jnp.mean(t, axis=-1, keepdims=True)
        var = jnp.mean((t - mu) ** 2, axis=-1, keepdims=True)
        return (t - mu) * jax.lax.rsqrt(var + LN_EPS) * g + b

    for layer in params["layers"]:
        a, m = layer["attn"], layer["mlp"]
        H, Dh = layer["heads"], layer["head_size"]
        B, N, _ = x.shape

        xn = ln(x, a["ln_g"][0], a["ln_b"][0])
        qkv = xn @ a["w_qkv"] + a["b_qkv"][0]
        q, k, v = jnp.split(qkv, 3, axis=-1)

        def split_heads(t):
            return t.reshape(B, N, H, Dh).transpose(0, 2, 1, 3)

        q, k, v = map(split_heads, (q, k, v))
        s = jnp.einsum("bhqd,bhkd->bhqk", q, k) / math.sqrt(Dh)
        p = jax.nn.softmax(s, axis=-1)
        o = jnp.einsum("bhqk,bhkd->bhqd", p, v)
        o = o.transpose(0, 2, 1, 3).reshape(B, N, H * Dh)
        x = (o @ a["w_out"] + a["b_out"][0]) + x

        xn = ln(x, m["ln_g"][0], m["ln_b"][0])
        h = xn @ m["w"] + m["b"][0]
        y = jax.nn.gelu(h, approximate=False)
        x = y + (x @ m["sel"] if "sel" in m else x)
    return x


if __name__ == "__main__":
    key = jax.random.PRNGKey(0)
    kx, kp = jax.random.split(key)

    # Small config: Transformer_layers_sizes=[32, 32, 16]
    #   layer 0: 32 -> 32 (plain residual), layer 1: 32 -> 16 (interp residual)
    B, N = 2, 8
    layer_sizes = [32, 32, 16]
    heads = [2, 2]
    head_sizes = [8, 8]

    x = jax.random.normal(kx, (B, N, layer_sizes[0]), jnp.float32)
    params = init_transformer_params(kp, layer_sizes, heads, head_sizes)

    out = transformer_forward(x, params)
    out = jax.block_until_ready(out)

    assert out.shape == (B, N, layer_sizes[-1]), out.shape
    ref = reference_forward(x, params)
    err = float(jnp.max(jnp.abs(out - ref)))
    if not jnp.allclose(out, ref, rtol=2e-3, atol=2e-3):
        raise AssertionError(f"mismatch vs reference, max abs err={err}")

    print("KERNEL_OK")
</pallas_src>

<mosaic_0001>
module attributes {stable_mosaic.version = 11 : i64} {
  func.func @kernel(%arg0: i32, %arg1: memref<1x8x32xf32, #tpu.memory_space<vmem>>, %arg2: memref<88x128xf32, #tpu.memory_space<vmem>>, %arg3: memref<120x128xf32, #tpu.memory_space<vmem>>, %arg4: memref<1x8x16xf32, #tpu.memory_space<vmem>>) attributes {dimension_semantics = [#tpu.dimension_semantics<parallel>], iteration_bounds = array<i64: 2>, scalar_prefetch = 0 : i64, scratch_operands = 0 : i64, tpu.core_type = #tpu.core_type<tc>, window_params = [{transform_indices = @transform_0, window_bounds = array<i64: 1, 8, 32>}, {pipeline_mode = #tpu.pipeline_mode<synchronous>, transform_indices = @transform_1, window_bounds = array<i64: 88, 128>}, {pipeline_mode = #tpu.pipeline_mode<synchronous>, transform_indices = @transform_2, window_bounds = array<i64: 120, 128>}, {transform_indices = @transform_3, window_bounds = array<i64: 1, 8, 16>}]} {
    %c0 = arith.constant 0 : index
    %c0_0 = arith.constant 0 : index
    %c0_1 = arith.constant 0 : index
    %0 = vector.load %arg1[%c0, %c0_0, %c0_1] : memref<1x8x32xf32, #tpu.memory_space<vmem>>, vector<1x8x32xf32>
    %1 = vector.shape_cast %0 : vector<1x8x32xf32> to vector<8x32xf32>
    %c0_2 = arith.constant 0 : index
    %c0_3 = arith.constant 0 : index
    %2 = vector.load %arg2[%c0_2, %c0_3] : memref<88x128xf32, #tpu.memory_space<vmem>>, vector<1x32xf32>
    %c1 = arith.constant 1 : index
    %c0_4 = arith.constant 0 : index
    %3 = vector.load %arg2[%c1, %c0_4] : memref<88x128xf32, #tpu.memory_space<vmem>>, vector<1x32xf32>
    %c2 = arith.constant 2 : index
    %c0_5 = arith.constant 0 : index
    %4 = vector.load %arg2[%c2, %c0_5] : memref<88x128xf32, #tpu.memory_space<vmem>>, vector<1x48xf32>
    %c3 = arith.constant 3 : index
    %c0_6 = arith.constant 0 : index
    %5 = vector.load %arg2[%c3, %c0_6] : memref<88x128xf32, #tpu.memory_space<vmem>>, vector<1x32xf32>
    %c4 = arith.constant 4 : index
    %c0_7 = arith.constant 0 : index
    %6 = vector.load %arg2[%c4, %c0_7] : memref<88x128xf32, #tpu.memory_space<vmem>>, vector<1x32xf32>
    %c5 = arith.constant 5 : index
    %c0_8 = arith.constant 0 : index
    %7 = vector.load %arg2[%c5, %c0_8] : memref<88x128xf32, #tpu.memory_space<vmem>>, vector<1x32xf32>
    %c6 = arith.constant 6 : index
    %c0_9 = arith.constant 0 : index
    %8 = vector.load %arg2[%c6, %c0_9] : memref<88x128xf32, #tpu.memory_space<vmem>>, vector<1x32xf32>
    %c8 = arith.constant 8 : index
    %c0_10 = arith.constant 0 : index
    %9 = vector.load %arg2[%c8, %c0_10] : memref<88x128xf32, #tpu.memory_space<vmem>>, vector<32x48xf32>
    %c40 = arith.constant 40 : index
    %c0_11 = arith.constant 0 : index
    %10 = vector.load %arg2[%c40, %c0_11] : memref<88x128xf32, #tpu.memory_space<vmem>>, vector<16x32xf32>
    %c56 = arith.constant 56 : index
    %c0_12 = arith.constant 0 : index
    %11 = vector.load %arg2[%c56, %c0_12] : memref<88x128xf32, #tpu.memory_space<vmem>>, vector<32x32xf32>
    %cst = arith.constant dense<0.000000e+00> : vector<8xf32>
    %12 = vector.multi_reduction <add>, %1, %cst [1] : vector<8x32xf32> to vector<8xf32>
    %13 = vector.shape_cast %12 : vector<8xf32> to vector<8x1xf32>
    %cst_13 = arith.constant 3.200000e+01 : f32
    %14 = vector.broadcast %cst_13 : f32 to vector<8x1xf32>
    %15 = arith.divf %13, %14 : vector<8x1xf32>
    %16 = arith.mulf %1, %1 : vector<8x32xf32>
    %cst_14 = arith.constant dense<0.000000e+00> : vector<8xf32>
    %17 = vector.multi_reduction <add>, %16, %cst_14 [1] : vector<8x32xf32> to vector<8xf32>
    %18 = vector.shape_cast %17 : vector<8xf32> to vector<8x1xf32>
    %cst_15 = arith.constant 3.200000e+01 : f32
    %19 = vector.broadcast %cst_15 : f32 to vector<8x1xf32>
    %20 = arith.divf %18, %19 : vector<8x1xf32>
    %21 = arith.mulf %15, %15 : vector<8x1xf32>
    %22 = arith.subf %20, %21 : vector<8x1xf32>
    %23 = vector.broadcast %15 : vector<8x1xf32> to vector<8x32xf32>
    %24 = arith.subf %1, %23 : vector<8x32xf32>
    %cst_16 = arith.constant 9.99999974E-6 : f32
    %25 = vector.broadcast %cst_16 : f32 to vector<8x1xf32>
    %26 = arith.addf %22, %25 : vector<8x1xf32>
    %27 = math.rsqrt %26 : vector<8x1xf32>
    %28 = vector.broadcast %27 : vector<8x1xf32> to vector<8x32xf32>
    %29 = arith.mulf %24, %28 : vector<8x32xf32>
    %30 = vector.broadcast %2 : vector<1x32xf32> to vector<8x32xf32>
    %31 = arith.mulf %29, %30 : vector<8x32xf32>
    %32 = vector.broadcast %3 : vector<1x32xf32> to vector<8x32xf32>
    %33 = arith.addf %31, %32 : vector<8x32xf32>
    %cst_17 = arith.constant dense<0.000000e+00> : vector<8x48xf32>
    %34 = tpu.matmul %33, %9, %cst_17 {dimension_numbers = #tpu.dot_dimension_numbers<[1], [0], [0], [1], [0, 0, 1, 1], [], []>} : vector<8x32xf32>, vector<32x48xf32>, vector<8x48xf32> -> vector<8x48xf32>
    %35 = vector.broadcast %4 : vector<1x48xf32> to vector<8x48xf32>
    %36 = arith.addf %34, %35 : vector<8x48xf32>
    %37 = vector.extract_strided_slice %36 {offsets = [0, 0], sizes = [8, 8], strides = [1, 1]} : vector<8x48xf32> to vector<8x8xf32>
    %38 = vector.extract_strided_slice %36 {offsets = [0, 16], sizes = [8, 8], strides = [1, 1]} : vector<8x48xf32> to vector<8x8xf32>
    %39 = vector.extract_strided_slice %36 {offsets = [0, 32], sizes = [8, 8], strides = [1, 1]} : vector<8x48xf32> to vector<8x8xf32>
    "tpu.trace_start"() <{level = 10 : i32, message = "qd,kd->qk"}> : () -> ()
    %cst_18 = arith.constant dense<0.000000e+00> : vector<8x8xf32>
    %40 = tpu.matmul %37, %38, %cst_18 {dimension_numbers = #tpu.dot_dimension_numbers<[1], [1], [0], [0], [0, 0, 1, 0], [], []>} : vector<8x8xf32>, vector<8x8xf32>, vector<8x8xf32> -> vector<8x8xf32>
    "tpu.trace_stop"() : () -> ()
    %cst_19 = arith.constant dense<0xFF800000> : vector<8xf32>
    %41 = vector.multi_reduction <maximumf>, %40, %cst_19 [1] : vector<8x8xf32> to vector<8xf32>
    %42 = vector.shape_cast %41 : vector<8xf32> to vector<8x1xf32>
    %43 = vector.broadcast %42 : vector<8x1xf32> to vector<8x8xf32>
    %44 = arith.subf %40, %43 : vector<8x8xf32>
    %45 = math.exp %44 : vector<8x8xf32>
    %cst_20 = arith.constant dense<0.000000e+00> : vector<8xf32>
    %46 = vector.multi_reduction <add>, %45, %cst_20 [1] : vector<8x8xf32> to vector<8xf32>
    %47 = vector.shape_cast %46 : vector<8xf32> to vector<8x1xf32>
    %48 = tpu.reciprocal %47 {approx = true} : vector<8x1xf32> -> vector<8x1xf32>
    %49 = arith.mulf %47, %48 : vector<8x1xf32>
    %cst_21 = arith.constant 2.000000e+00 : f32
    %50 = vector.broadcast %cst_21 : f32 to vector<8x1xf32>
    %51 = arith.subf %50, %49 : vector<8x1xf32>
    %52 = arith.mulf %48, %51 : vector<8x1xf32>
    %53 = vector.broadcast %52 : vector<8x1xf32> to vector<8x8xf32>
    %54 = arith.mulf %45, %53 : vector<8x8xf32>
    %cst_22 = arith.constant dense<0.000000e+00> : vector<8x8xf32>
    %55 = tpu.matmul %54, %39, %cst_22 {dimension_numbers = #tpu.dot_dimension_numbers<[1], [0], [0], [1], [0, 0, 1, 1], [], []>} : vector<8x8xf32>, vector<8x8xf32>, vector<8x8xf32> -> vector<8x8xf32>
    %56 = vector.extract_strided_slice %36 {offsets = [0, 8], sizes = [8, 8], strides = [1, 1]} : vector<8x48xf32> to vector<8x8xf32>
    %57 = vector.extract_strided_slice %36 {offsets = [0, 24], sizes = [8, 8], strides = [1, 1]} : vector<8x48xf32> to vector<8x8xf32>
    %58 = vector.extract_strided_slice %36 {offsets = [0, 40], sizes = [8, 8], strides = [1, 1]} : vector<8x48xf32> to vector<8x8xf32>
    "tpu.trace_start"() <{level = 10 : i32, message = "qd,kd->qk"}> : () -> ()
    %cst_23 = arith.constant dense<0.000000e+00> : vector<8x8xf32>
    %59 = tpu.matmul %56, %57, %cst_23 {dimension_numbers = #tpu.dot_dimension_numbers<[1], [1], [0], [0], [0, 0, 1, 0], [], []>} : vector<8x8xf32>, vector<8x8xf32>, vector<8x8xf32> -> vector<8x8xf32>
    "tpu.trace_stop"() : () -> ()
    %cst_24 = arith.constant dense<0xFF800000> : vector<8xf32>
    %60 = vector.multi_reduction <maximumf>, %59, %cst_24 [1] : vector<8x8xf32> to vector<8xf32>
    %61 = vector.shape_cast %60 : vector<8xf32> to vector<8x1xf32>
    %62 = vector.broadcast %61 : vector<8x1xf32> to vector<8x8xf32>
    %63 = arith.subf %59, %62 : vector<8x8xf32>
    %64 = math.exp %63 : vector<8x8xf32>
    %cst_25 = arith.constant dense<0.000000e+00> : vector<8xf32>
    %65 = vector.multi_reduction <add>, %64, %cst_25 [1] : vector<8x8xf32> to vector<8xf32>
    %66 = vector.shape_cast %65 : vector<8xf32> to vector<8x1xf32>
    %67 = tpu.reciprocal %66 {approx = true} : vector<8x1xf32> -> vector<8x1xf32>
    %68 = arith.mulf %66, %67 : vector<8x1xf32>
    %cst_26 = arith.constant 2.000000e+00 : f32
    %69 = vector.broadcast %cst_26 : f32 to vector<8x1xf32>
    %70 = arith.subf %69, %68 : vector<8x1xf32>
    %71 = arith.mulf %67, %70 : vector<8x1xf32>
    %72 = vector.broadcast %71 : vector<8x1xf32> to vector<8x8xf32>
    %73 = arith.mulf %64, %72 : vector<8x8xf32>
    %cst_27 = arith.constant dense<0.000000e+00> : vector<8x8xf32>
    %74 = tpu.matmul %73, %58, %cst_27 {dimension_numbers = #tpu.dot_dimension_numbers<[1], [0], [0], [1], [0, 0, 1, 1], [], []>} : vector<8x8xf32>, vector<8x8xf32>, vector<8x8xf32> -> vector<8x8xf32>
    %75 = tpu.concatenate %55, %74 in 1 : vector<8x8xf32>, vector<8x8xf32> -> vector<8x16xf32>
    %cst_28 = arith.constant dense<0.000000e+00> : vector<8x32xf32>
    %76 = tpu.matmul %75, %10, %cst_28 {dimension_numbers = #tpu.dot_dimension_numbers<[1], [0], [0], [1], [0, 0, 1, 1], [], []>} : vector<8x16xf32>, vector<16x32xf32>, vector<8x32xf32> -> vector<8x32xf32>
    %77 = arith.addf %1, %76 : vector<8x32xf32>
    %78 = vector.broadcast %5 : vector<1x32xf32> to vector<8x32xf32>
    %79 = arith.addf %77, %78 : vector<8x32xf32>
    %cst_29 = arith.constant dense<0.000000e+00> : vector<8xf32>
    %80 = vector.multi_reduction <add>, %79, %cst_29 [1] : vector<8x32xf32> to vector<8xf32>
    %81 = vector.shape_cast %80 : vector<8xf32> to vector<8x1xf32>
    %cst_30 = arith.constant 3.200000e+01 : f32
    %82 = vector.broadcast %cst_30 : f32 to vector<8x1xf32>
    %83 = arith.divf %81, %82 : vector<8x1xf32>
    %84 = arith.mulf %79, %79 : vector<8x32xf32>
    %cst_31 = arith.constant dense<0.000000e+00> : vector<8xf32>
    %85 = vector.multi_reduction <add>, %84, %cst_31 [1] : vector<8x32xf32> to vector<8xf32>
    %86 = vector.shape_cast %85 : vector<8xf32> to vector<8x1xf32>
    %cst_32 = arith.constant 3.200000e+01 : f32
    %87 = vector.broadcast %cst_32 : f32 to vector<8x1xf32>
    %88 = arith.divf %86, %87 : vector<8x1xf32>
    %89 = arith.mulf %83, %83 : vector<8x1xf32>
    %90 = arith.subf %88, %89 : vector<8x1xf32>
    %91 = vector.broadcast %83 : vector<8x1xf32> to vector<8x32xf32>
    %92 = arith.subf %79, %91 : vector<8x32xf32>
    %cst_33 = arith.constant 9.99999974E-6 : f32
    %93 = vector.broadcast %cst_33 : f32 to vector<8x1xf32>
    %94 = arith.addf %90, %93 : vector<8x1xf32>
    %95 = math.rsqrt %94 : vector<8x1xf32>
    %96 = vector.broadcast %95 : vector<8x1xf32> to vector<8x32xf32>
    %97 = arith.mulf %92, %96 : vector<8x32xf32>
    %98 = vector.broadcast %6 : vector<1x32xf32> to vector<8x32xf32>
    %99 = arith.mulf %97, %98 : vector<8x32xf32>
    %100 = vector.broadcast %7 : vector<1x32xf32> to vector<8x32xf32>
    %101 = arith.addf %99, %100 : vector<8x32xf32>
    %cst_34 = arith.constant dense<0.000000e+00> : vector<8x32xf32>
    %102 = tpu.matmul %101, %11, %cst_34 {dimension_numbers = #tpu.dot_dimension_numbers<[1], [0], [0], [1], [0, 0, 1, 1], [], []>} : vector<8x32xf32>, vector<32x32xf32>, vector<8x32xf32> -> vector<8x32xf32>
    %103 = vector.broadcast %8 : vector<1x32xf32> to vector<8x32xf32>
    %104 = arith.addf %102, %103 : vector<8x32xf32>
    %cst_35 = arith.constant 5.000000e-01 : f32
    %105 = vector.broadcast %cst_35 : f32 to vector<8x32xf32>
    %106 = arith.mulf %105, %104 : vector<8x32xf32>
    %cst_36 = arith.constant 0.707106769 : f32
    %107 = vector.broadcast %cst_36 : f32 to vector<8x32xf32>
    %108 = arith.mulf %104, %107 : vector<8x32xf32>
    %cst_37 = arith.constant 0.000000e+00 : f32
    %109 = vector.broadcast %cst_37 : f32 to vector<8x32xf32>
    %110 = arith.cmpf oge, %108, %109 : vector<8x32xf32>
    %cst_38 = arith.constant 1.000000e+00 : f32
    %cst_39 = arith.constant -1.000000e+00 : f32
    %111 = vector.broadcast %cst_38 : f32 to vector<8x32xf32>
    %112 = vector.broadcast %cst_39 : f32 to vector<8x32xf32>
    %113 = arith.select %110, %111, %112 : vector<8x32xi1>, vector<8x32xf32>
    %114 = math.absf %108 : vector<8x32xf32>
    %cst_40 = arith.constant 0.327591091 : f32
    %115 = vector.broadcast %cst_40 : f32 to vector<8x32xf32>
    %116 = arith.mulf %115, %114 : vector<8x32xf32>
    %cst_41 = arith.constant 1.000000e+00 : f32
    %117 = vector.broadcast %cst_41 : f32 to vector<8x32xf32>
    %118 = arith.addf %117, %116 : vector<8x32xf32>
    %cst_42 = arith.constant 1.000000e+00 : f32
    %119 = vector.broadcast %cst_42 : f32 to vector<8x32xf32>
    %120 = arith.divf %119, %118 : vector<8x32xf32>
    %cst_43 = arith.constant 1.06140542 : f32
    %121 = vector.broadcast %cst_43 : f32 to vector<8x32xf32>
    %122 = arith.mulf %121, %120 : vector<8x32xf32>
    %cst_44 = arith.constant -1.45315206 : f32
    %123 = vector.broadcast %cst_44 : f32 to vector<8x32xf32>
    %124 = arith.addf %122, %123 : vector<8x32xf32>
    %125 = arith.mulf %124, %120 : vector<8x32xf32>
    %cst_45 = arith.constant 1.42141378 : f32
    %126 = vector.broadcast %cst_45 : f32 to vector<8x32xf32>
    %127 = arith.addf %125, %126 : vector<8x32xf32>
    %128 = arith.mulf %127, %120 : vector<8x32xf32>
    %cst_46 = arith.constant -0.284496725 : f32
    %129 = vector.broadcast %cst_46 : f32 to vector<8x32xf32>
    %130 = arith.addf %128, %129 : vector<8x32xf32>
    %131 = arith.mulf %130, %120 : vector<8x32xf32>
    %cst_47 = arith.constant 0.254829586 : f32
    %132 = vector.broadcast %cst_47 : f32 to vector<8x32xf32>
    %133 = arith.addf %131, %132 : vector<8x32xf32>
    %134 = arith.mulf %133, %120 : vector<8x32xf32>
    %cst_48 = arith.constant 0.000000e+00 : f32
    %135 = vector.broadcast %cst_48 : f32 to vector<8x32xf32>
    %136 = arith.subf %135, %114 : vector<8x32xf32>
    %137 = arith.mulf %136, %114 : vector<8x32xf32>
    %138 = math.exp %137 : vector<8x32xf32>
    %139 = arith.mulf %134, %138 : vector<8x32xf32>
    %cst_49 = arith.constant 1.000000e+00 : f32
    %140 = vector.broadcast %cst_49 : f32 to vector<8x32xf32>
    %141 = arith.subf %140, %139 : vector<8x32xf32>
    %142 = arith.mulf %113, %141 : vector<8x32xf32>
    %cst_50 = arith.constant 1.000000e+00 : f32
    %143 = vector.broadcast %cst_50 : f32 to vector<8x32xf32>
    %144 = arith.addf %143, %142 : vector<8x32xf32>
    %145 = arith.mulf %106, %144 : vector<8x32xf32>
    %146 = arith.addf %145, %79 : vector<8x32xf32>
    %c0_51 = arith.constant 0 : index
    %c0_52 = arith.constant 0 : index
    %147 = vector.load %arg3[%c0_51, %c0_52] : memref<120x128xf32, #tpu.memory_space<vmem>>, vector<1x32xf32>
    %c1_53 = arith.constant 1 : index
    %c0_54 = arith.constant 0 : index
    %148 = vector.load %arg3[%c1_53, %c0_54] : memref<120x128xf32, #tpu.memory_space<vmem>>, vector<1x32xf32>
    %c2_55 = arith.constant 2 : index
    %c0_56 = arith.constant 0 : index
    %149 = vector.load %arg3[%c2_55, %c0_56] : memref<120x128xf32, #tpu.memory_space<vmem>>, vector<1x48xf32>
    %c3_57 = arith.constant 3 : index
    %c0_58 = arith.constant 0 : index
    %150 = vector.load %arg3[%c3_57, %c0_58] : memref<120x128xf32, #tpu.memory_space<vmem>>, vector<1x32xf32>
    %c4_59 = arith.constant 4 : index
    %c0_60 = arith.constant 0 : index
    %151 = vector.load %arg3[%c4_59, %c0_60] : memref<120x128xf32, #tpu.memory_space<vmem>>, vector<1x32xf32>
    %c5_61 = arith.constant 5 : index
    %c0_62 = arith.constant 0 : index
    %152 = vector.load %arg3[%c5_61, %c0_62] : memref<120x128xf32, #tpu.memory_space<vmem>>, vector<1x32xf32>
    %c6_63 = arith.constant 6 : index
    %c0_64 = arith.constant 0 : index
    %153 = vector.load %arg3[%c6_63, %c0_64] : memref<120x128xf32, #tpu.memory_space<vmem>>, vector<1x16xf32>
    %c8_65 = arith.constant 8 : index
    %c0_66 = arith.constant 0 : index
    %154 = vector.load %arg3[%c8_65, %c0_66] : memref<120x128xf32, #tpu.memory_space<vmem>>, vector<32x48xf32>
    %c40_67 = arith.constant 40 : index
    %c0_68 = arith.constant 0 : index
    %155 = vector.load %arg3[%c40_67, %c0_68] : memref<120x128xf32, #tpu.memory_space<vmem>>, vector<16x32xf32>
    %c56_69 = arith.constant 56 : index
    %c0_70 = arith.constant 0 : index
    %156 = vector.load %arg3[%c56_69, %c0_70] : memref<120x128xf32, #tpu.memory_space<vmem>>, vector<32x16xf32>
    %cst_71 = arith.constant dense<0.000000e+00> : vector<8xf32>
    %157 = vector.multi_reduction <add>, %146, %cst_71 [1] : vector<8x32xf32> to vector<8xf32>
    %158 = vector.shape_cast %157 : vector<8xf32> to vector<8x1xf32>
    %cst_72 = arith.constant 3.200000e+01 : f32
    %159 = vector.broadcast %cst_72 : f32 to vector<8x1xf32>
    %160 = arith.divf %158, %159 : vector<8x1xf32>
    %161 = arith.mulf %146, %146 : vector<8x32xf32>
    %cst_73 = arith.constant dense<0.000000e+00> : vector<8xf32>
    %162 = vector.multi_reduction <add>, %161, %cst_73 [1] : vector<8x32xf32> to vector<8xf32>
    %163 = vector.shape_cast %162 : vector<8xf32> to vector<8x1xf32>
    %cst_74 = arith.constant 3.200000e+01 : f32
    %164 = vector.broadcast %cst_74 : f32 to vector<8x1xf32>
    %165 = arith.divf %163, %164 : vector<8x1xf32>
    %166 = arith.mulf %160, %160 : vector<8x1xf32>
    %167 = arith.subf %165, %166 : vector<8x1xf32>
    %168 = vector.broadcast %160 : vector<8x1xf32> to vector<8x32xf32>
    %169 = arith.subf %146, %168 : vector<8x32xf32>
    %cst_75 = arith.constant 9.99999974E-6 : f32
    %170 = vector.broadcast %cst_75 : f32 to vector<8x1xf32>
    %171 = arith.addf %167, %170 : vector<8x1xf32>
    %172 = math.rsqrt %171 : vector<8x1xf32>
    %173 = vector.broadcast %172 : vector<8x1xf32> to vector<8x32xf32>
    %174 = arith.mulf %169, %173 : vector<8x32xf32>
    %175 = vector.broadcast %147 : vector<1x32xf32> to vector<8x32xf32>
    %176 = arith.mulf %174, %175 : vector<8x32xf32>
    %177 = vector.broadcast %148 : vector<1x32xf32> to vector<8x32xf32>
    %178 = arith.addf %176, %177 : vector<8x32xf32>
    %cst_76 = arith.constant dense<0.000000e+00> : vector<8x48xf32>
    %179 = tpu.matmul %178, %154, %cst_76 {dimension_numbers = #tpu.dot_dimension_numbers<[1], [0], [0], [1], [0, 0, 1, 1], [], []>} : vector<8x32xf32>, vector<32x48xf32>, vector<8x48xf32> -> vector<8x48xf32>
    %180 = vector.broadcast %149 : vector<1x48xf32> to vector<8x48xf32>
    %181 = arith.addf %179, %180 : vector<8x48xf32>
    %182 = vector.extract_strided_slice %181 {offsets = [0, 0], sizes = [8, 8], strides = [1, 1]} : vector<8x48xf32> to vector<8x8xf32>
    %183 = vector.extract_strided_slice %181 {offsets = [0, 16], sizes = [8, 8], strides = [1, 1]} : vector<8x48xf32> to vector<8x8xf32>
    %184 = vector.extract_strided_slice %181 {offsets = [0, 32], sizes = [8, 8], strides = [1, 1]} : vector<8x48xf32> to vector<8x8xf32>
    "tpu.trace_start"() <{level = 10 : i32, message = "qd,kd->qk"}> : () -> ()
    %cst_77 = arith.constant dense<0.000000e+00> : vector<8x8xf32>
    %185 = tpu.matmul %182, %183, %cst_77 {dimension_numbers = #tpu.dot_dimension_numbers<[1], [1], [0], [0], [0, 0, 1, 0], [], []>} : vector<8x8xf32>, vector<8x8xf32>, vector<8x8xf32> -> vector<8x8xf32>
    "tpu.trace_stop"() : () -> ()
    %cst_78 = arith.constant dense<0xFF800000> : vector<8xf32>
    %186 = vector.multi_reduction <maximumf>, %185, %cst_78 [1] : vector<8x8xf32> to vector<8xf32>
    %187 = vector.shape_cast %186 : vector<8xf32> to vector<8x1xf32>
    %188 = vector.broadcast %187 : vector<8x1xf32> to vector<8x8xf32>
    %189 = arith.subf %185, %188 : vector<8x8xf32>
    %190 = math.exp %189 : vector<8x8xf32>
    %cst_79 = arith.constant dense<0.000000e+00> : vector<8xf32>
    %191 = vector.multi_reduction <add>, %190, %cst_79 [1] : vector<8x8xf32> to vector<8xf32>
    %192 = vector.shape_cast %191 : vector<8xf32> to vector<8x1xf32>
    %193 = tpu.reciprocal %192 {approx = true} : vector<8x1xf32> -> vector<8x1xf32>
    %194 = arith.mulf %192, %193 : vector<8x1xf32>
    %cst_80 = arith.constant 2.000000e+00 : f32
    %195 = vector.broadcast %cst_80 : f32 to vector<8x1xf32>
    %196 = arith.subf %195, %194 : vector<8x1xf32>
    %197 = arith.mulf %193, %196 : vector<8x1xf32>
    %198 = vector.broadcast %197 : vector<8x1xf32> to vector<8x8xf32>
    %199 = arith.mulf %190, %198 : vector<8x8xf32>
    %cst_81 = arith.constant dense<0.000000e+00> : vector<8x8xf32>
    %200 = tpu.matmul %199, %184, %cst_81 {dimension_numbers = #tpu.dot_dimension_numbers<[1], [0], [0], [1], [0, 0, 1, 1], [], []>} : vector<8x8xf32>, vector<8x8xf32>, vector<8x8xf32> -> vector<8x8xf32>
    %201 = vector.extract_strided_slice %181 {offsets = [0, 8], sizes = [8, 8], strides = [1, 1]} : vector<8x48xf32> to vector<8x8xf32>
    %202 = vector.extract_strided_slice %181 {offsets = [0, 24], sizes = [8, 8], strides = [1, 1]} : vector<8x48xf32> to vector<8x8xf32>
    %203 = vector.extract_strided_slice %181 {offsets = [0, 40], sizes = [8, 8], strides = [1, 1]} : vector<8x48xf32> to vector<8x8xf32>
    "tpu.trace_start"() <{level = 10 : i32, message = "qd,kd->qk"}> : () -> ()
    %cst_82 = arith.constant dense<0.000000e+00> : vector<8x8xf32>
    %204 = tpu.matmul %201, %202, %cst_82 {dimension_numbers = #tpu.dot_dimension_numbers<[1], [1], [0], [0], [0, 0, 1, 0], [], []>} : vector<8x8xf32>, vector<8x8xf32>, vector<8x8xf32> -> vector<8x8xf32>
    "tpu.trace_stop"() : () -> ()
    %cst_83 = arith.constant dense<0xFF800000> : vector<8xf32>
    %205 = vector.multi_reduction <maximumf>, %204, %cst_83 [1] : vector<8x8xf32> to vector<8xf32>
    %206 = vector.shape_cast %205 : vector<8xf32> to vector<8x1xf32>
    %207 = vector.broadcast %206 : vector<8x1xf32> to vector<8x8xf32>
    %208 = arith.subf %204, %207 : vector<8x8xf32>
    %209 = math.exp %208 : vector<8x8xf32>
    %cst_84 = arith.constant dense<0.000000e+00> : vector<8xf32>
    %210 = vector.multi_reduction <add>, %209, %cst_84 [1] : vector<8x8xf32> to vector<8xf32>
    %211 = vector.shape_cast %210 : vector<8xf32> to vector<8x1xf32>
    %212 = tpu.reciprocal %211 {approx = true} : vector<8x1xf32> -> vector<8x1xf32>
    %213 = arith.mulf %211, %212 : vector<8x1xf32>
    %cst_85 = arith.constant 2.000000e+00 : f32
    %214 = vector.broadcast %cst_85 : f32 to vector<8x1xf32>
    %215 = arith.subf %214, %213 : vector<8x1xf32>
    %216 = arith.mulf %212, %215 : vector<8x1xf32>
    %217 = vector.broadcast %216 : vector<8x1xf32> to vector<8x8xf32>
    %218 = arith.mulf %209, %217 : vector<8x8xf32>
    %cst_86 = arith.constant dense<0.000000e+00> : vector<8x8xf32>
    %219 = tpu.matmul %218, %203, %cst_86 {dimension_numbers = #tpu.dot_dimension_numbers<[1], [0], [0], [1], [0, 0, 1, 1], [], []>} : vector<8x8xf32>, vector<8x8xf32>, vector<8x8xf32> -> vector<8x8xf32>
    %220 = tpu.concatenate %200, %219 in 1 : vector<8x8xf32>, vector<8x8xf32> -> vector<8x16xf32>
    %cst_87 = arith.constant dense<0.000000e+00> : vector<8x32xf32>
    %221 = tpu.matmul %220, %155, %cst_87 {dimension_numbers = #tpu.dot_dimension_numbers<[1], [0], [0], [1], [0, 0, 1, 1], [], []>} : vector<8x16xf32>, vector<16x32xf32>, vector<8x32xf32> -> vector<8x32xf32>
    %222 = arith.addf %146, %221 : vector<8x32xf32>
    %223 = vector.broadcast %150 : vector<1x32xf32> to vector<8x32xf32>
    %224 = arith.addf %222, %223 : vector<8x32xf32>
    %cst_88 = arith.constant dense<0.000000e+00> : vector<8xf32>
    %225 = vector.multi_reduction <add>, %224, %cst_88 [1] : vector<8x32xf32> to vector<8xf32>
    %226 = vector.shape_cast %225 : vector<8xf32> to vector<8x1xf32>
    %cst_89 = arith.constant 3.200000e+01 : f32
    %227 = vector.broadcast %cst_89 : f32 to vector<8x1xf32>
    %228 = arith.divf %226, %227 : vector<8x1xf32>
    %229 = arith.mulf %224, %224 : vector<8x32xf32>
    %cst_90 = arith.constant dense<0.000000e+00> : vector<8xf32>
    %230 = vector.multi_reduction <add>, %229, %cst_90 [1] : vector<8x32xf32> to vector<8xf32>
    %231 = vector.shape_cast %230 : vector<8xf32> to vector<8x1xf32>
    %cst_91 = arith.constant 3.200000e+01 : f32
    %232 = vector.broadcast %cst_91 : f32 to vector<8x1xf32>
    %233 = arith.divf %231, %232 : vector<8x1xf32>
    %234 = arith.mulf %228, %228 : vector<8x1xf32>
    %235 = arith.subf %233, %234 : vector<8x1xf32>
    %236 = vector.broadcast %228 : vector<8x1xf32> to vector<8x32xf32>
    %237 = arith.subf %224, %236 : vector<8x32xf32>
    %cst_92 = arith.constant 9.99999974E-6 : f32
    %238 = vector.broadcast %cst_92 : f32 to vector<8x1xf32>
    %239 = arith.addf %235, %238 : vector<8x1xf32>
    %240 = math.rsqrt %239 : vector<8x1xf32>
    %241 = vector.broadcast %240 : vector<8x1xf32> to vector<8x32xf32>
    %242 = arith.mulf %237, %241 : vector<8x32xf32>
    %243 = vector.broadcast %151 : vector<1x32xf32> to vector<8x32xf32>
    %244 = arith.mulf %242, %243 : vector<8x32xf32>
    %245 = vector.broadcast %152 : vector<1x32xf32> to vector<8x32xf32>
    %246 = arith.addf %244, %245 : vector<8x32xf32>
    %cst_93 = arith.constant dense<0.000000e+00> : vector<8x16xf32>
    %247 = tpu.matmul %246, %156, %cst_93 {dimension_numbers = #tpu.dot_dimension_numbers<[1], [0], [0], [1], [0, 0, 1, 1], [], []>} : vector<8x32xf32>, vector<32x16xf32>, vector<8x16xf32> -> vector<8x16xf32>
    %248 = vector.broadcast %153 : vector<1x16xf32> to vector<8x16xf32>
    %249 = arith.addf %247, %248 : vector<8x16xf32>
    %cst_94 = arith.constant 5.000000e-01 : f32
    %250 = vector.broadcast %cst_94 : f32 to vector<8x16xf32>
    %251 = arith.mulf %250, %249 : vector<8x16xf32>
    %cst_95 = arith.constant 0.707106769 : f32
    %252 = vector.broadcast %cst_95 : f32 to vector<8x16xf32>
    %253 = arith.mulf %249, %252 : vector<8x16xf32>
    %cst_96 = arith.constant 0.000000e+00 : f32
    %254 = vector.broadcast %cst_96 : f32 to vector<8x16xf32>
    %255 = arith.cmpf oge, %253, %254 : vector<8x16xf32>
    %cst_97 = arith.constant 1.000000e+00 : f32
    %cst_98 = arith.constant -1.000000e+00 : f32
    %256 = vector.broadcast %cst_97 : f32 to vector<8x16xf32>
    %257 = vector.broadcast %cst_98 : f32 to vector<8x16xf32>
    %258 = arith.select %255, %256, %257 : vector<8x16xi1>, vector<8x16xf32>
    %259 = math.absf %253 : vector<8x16xf32>
    %cst_99 = arith.constant 0.327591091 : f32
    %260 = vector.broadcast %cst_99 : f32 to vector<8x16xf32>
    %261 = arith.mulf %260, %259 : vector<8x16xf32>
    %cst_100 = arith.constant 1.000000e+00 : f32
    %262 = vector.broadcast %cst_100 : f32 to vector<8x16xf32>
    %263 = arith.addf %262, %261 : vector<8x16xf32>
    %cst_101 = arith.constant 1.000000e+00 : f32
    %264 = vector.broadcast %cst_101 : f32 to vector<8x16xf32>
    %265 = arith.divf %264, %263 : vector<8x16xf32>
    %cst_102 = arith.constant 1.06140542 : f32
    %266 = vector.broadcast %cst_102 : f32 to vector<8x16xf32>
    %267 = arith.mulf %266, %265 : vector<8x16xf32>
    %cst_103 = arith.constant -1.45315206 : f32
    %268 = vector.broadcast %cst_103 : f32 to vector<8x16xf32>
    %269 = arith.addf %267, %268 : vector<8x16xf32>
    %270 = arith.mulf %269, %265 : vector<8x16xf32>
    %cst_104 = arith.constant 1.42141378 : f32
    %271 = vector.broadcast %cst_104 : f32 to vector<8x16xf32>
    %272 = arith.addf %270, %271 : vector<8x16xf32>
    %273 = arith.mulf %272, %265 : vector<8x16xf32>
    %cst_105 = arith.constant -0.284496725 : f32
    %274 = vector.broadcast %cst_105 : f32 to vector<8x16xf32>
    %275 = arith.addf %273, %274 : vector<8x16xf32>
    %276 = arith.mulf %275, %265 : vector<8x16xf32>
    %cst_106 = arith.constant 0.254829586 : f32
    %277 = vector.broadcast %cst_106 : f32 to vector<8x16xf32>
    %278 = arith.addf %276, %277 : vector<8x16xf32>
    %279 = arith.mulf %278, %265 : vector<8x16xf32>
    %cst_107 = arith.constant 0.000000e+00 : f32
    %280 = vector.broadcast %cst_107 : f32 to vector<8x16xf32>
    %281 = arith.subf %280, %259 : vector<8x16xf32>
    %282 = arith.mulf %281, %259 : vector<8x16xf32>
    %283 = math.exp %282 : vector<8x16xf32>
    %284 = arith.mulf %279, %283 : vector<8x16xf32>
    %cst_108 = arith.constant 1.000000e+00 : f32
    %285 = vector.broadcast %cst_108 : f32 to vector<8x16xf32>
    %286 = arith.subf %285, %284 : vector<8x16xf32>
    %287 = arith.mulf %258, %286 : vector<8x16xf32>
    %cst_109 = arith.constant 1.000000e+00 : f32
    %288 = vector.broadcast %cst_109 : f32 to vector<8x16xf32>
    %289 = arith.addf %288, %287 : vector<8x16xf32>
    %290 = arith.mulf %251, %289 : vector<8x16xf32>
    %c88 = arith.constant 88 : index
    %c0_110 = arith.constant 0 : index
    %291 = vector.load %arg3[%c88, %c0_110] : memref<120x128xf32, #tpu.memory_space<vmem>>, vector<32x16xf32>
    %cst_111 = arith.constant dense<0.000000e+00> : vector<8x16xf32>
    %292 = tpu.matmul %224, %291, %cst_111 {dimension_numbers = #tpu.dot_dimension_numbers<[1], [0], [0], [1], [0, 0, 1, 1], [], []>} : vector<8x32xf32>, vector<32x16xf32>, vector<8x16xf32> -> vector<8x16xf32>
    %293 = arith.addf %290, %292 : vector<8x16xf32>
    %c0_112 = arith.constant 0 : index
    %c0_113 = arith.constant 0 : index
    %c0_114 = arith.constant 0 : index
    %294 = vector.load %arg4[%c0_112, %c0_113, %c0_114] : memref<1x8x16xf32, #tpu.memory_space<vmem>>, vector<1x8x16xf32>
    %295 = vector.shape_cast %294 : vector<1x8x16xf32> to vector<8x16xf32>
    %296 = vector.shape_cast %293 : vector<8x16xf32> to vector<1x8x16xf32>
    tpu.vector_store %arg4[%c0_112, %c0_113, %c0_114], %296 {strides = array<i32>} : memref<1x8x16xf32, #tpu.memory_space<vmem>>, vector<1x8x16xf32>,
    return
  }
  func.func @transform_0(%arg0: i32) -> (i32, i32, i32) {
    %c0_i32 = arith.constant 0 : i32
    %c0_i32_0 = arith.constant 0 : i32
    %c0_i32_1 = arith.constant 0 : i32
    return %arg0, %c0_i32, %c0_i32_0 : i32, i32, i32
  }
  func.func @transform_1(%arg0: i32) -> (i32, i32) {
    %c0_i32 = arith.constant 0 : i32
    %c0_i32_0 = arith.constant 0 : i32
    %c0_i32_1 = arith.constant 0 : i32
    return %c0_i32, %c0_i32_0 : i32, i32
  }
  func.func @transform_2(%arg0: i32) -> (i32, i32) {
    %c0_i32 = arith.constant 0 : i32
    %c0_i32_0 = arith.constant 0 : i32
    %c0_i32_1 = arith.constant 0 : i32
    return %c0_i32, %c0_i32_0 : i32, i32
  }
  func.func @transform_3(%arg0: i32) -> (i32, i32, i32) {
    %c0_i32 = arith.constant 0 : i32
    %c0_i32_0 = arith.constant 0 : i32
    %c0_i32_1 = arith.constant 0 : i32
    return %arg0, %c0_i32, %c0_i32_0 : i32, i32, i32
  }
}

</mosaic_0001>

<llo_original>
// kernel: tpu_custom_call.1
$region0: #{tpu_custom_call.1}
  #allocation0 [shape = 'u32[]', space=smem, size = 0x4, offset = 0x4, fixed_abs, tag = 'smem constant byte address 0x4 - core index']
  #allocation1 [shape = 'u32[144,128]{1,0:T(1,128)}', space=vmem, size = 0x12000, scoped, tag = 'internal scratch']
  %s0 = inlined_call_operand.hbm [shape: f32[2,8,32], index: 0, kind: input, shape index: {}]
  %s1 = inlined_call_operand.hbm [shape: f32[88,128], index: 1, kind: input, shape index: {}]
  %s2 = inlined_call_operand.hbm [shape: f32[120,128], index: 2, kind: input, shape index: {}]
  %s3 = inlined_call_operand.hbm [shape: f32[2,8,16], index: 3, kind: output, shape index: {}]
  %s4 = sld [smem:[#allocation0]]
  $region57: #{tpu_custom_call.1} parent=0
    _
  %s6 = ssub.s32 1, %s4
  %s7 = scalar_select 0, %s6, %s4
  $region1: #{tpu_custom_call.1} parent=0
    #allocation2 [shape = 'u8[8192]{0}', space=vmem, size = 0x2000, scoped, tag = 'input window, operand 0']
    #allocation3 [shape = 's32[2]{0}', space=sflag, size = 0x8, scoped, tag = 'scoped memory for tpu_custom_call.1']
    #allocation4 [shape = 's32[2]{0}', space=sflag, size = 0x8, scoped, tag = 'scoped memory for tpu_custom_call.1']
    #allocation5 [shape = 'u8[45056]{0}', space=vmem, size = 0xb000, scoped, tag = 'input window, operand 1, single buffered']
    #allocation6 [shape = 's32[1]{0}', space=sflag, size = 0x4, scoped, tag = 'scoped memory for tpu_custom_call.1']
    #allocation7 [shape = 'u8[61440]{0}', space=vmem, size = 0xf000, scoped, tag = 'input window, operand 2, single buffered']
    #allocation8 [shape = 'u8[8192]{0}', space=vmem, size = 0x2000, scoped, tag = 'output window, operand 0']
    %8 = vsyncpa [#allocation3], 0
    %s9 = scalar_lea.sflag [#allocation3], 1
    %10 = vsyncpa %s9, 0
    %11 = vsyncpa [#allocation6], 0
    %12 = vsyncpa [#allocation4], 0
    %s13 = scalar_lea.sflag [#allocation4], 1
    %14 = vsyncpa %s13, 0
    loop: start=0, step=1, limit=4
    $region2: #{tpu_custom_call.1} parent=1 // loop_pre_header
      _
    $region3: #{tpu_custom_call.1} parent=1 // loop_header
      %s16 = sphi 0, %s20
      %p17 = scmp.ge.s32.totalorder %s16, 4
      %s26 = sphi 0, %s28
      %s29 = sphi 0, %s26
      %s30 = sphi 0, %s29
      %s46 = sphi 0, %s30
      %s50 = sphi 0, %s50
      %s52 = sphi 0, %s50
      %s53 = sphi 0, %s52
      %s67 = sphi 0, %s53
      %s71 = sphi 0, %s71
      %s73 = sphi 0, %s71
      %s74 = sphi 0, %s73
      %s88 = sphi 0, %s74
      %s94 = sphi 0, %s96
      %s97 = sphi 0, %s94
      %s98 = sphi 0, %s97
      %s114 = sphi 0, %s98
    $region4: #{tpu_custom_call.1} parent=1 // loop_header_branch
      %19 = sbr.rel (%p17) target = $region8
    $region5: #{tpu_custom_call.1} parent=1 // loop_body
      %s21 = ssub.s32 %s16, 1
      %s22 = ssub.s32 %s16, 2
      %s23 = sadd.s32 %s16, 1
      %s24 = ssub.s32 %s16, %s23
      %p25 = scmp.eq.s32.totalorder %s24, 0
      %s27 = sadd.s32 %s26, 1
      %s28 = scalar_select %p25, %s26, %s27
      %p31 = pneg %p25
      %p32 = scmp.eq.s32.totalorder %s16, 1
      %p33 = por %p31, %p32
      %p34 = scmp.ne.s32.totalorder %s26, %s29
      %p35 = scmp.eq.s32.totalorder %s16, 0
      %p36 = por %p34, %p35
      %p37 = scmp.ne.s32.totalorder %s26, %s29
      %p38 = scmp.eq.s32.totalorder %s21, 1
      %p39 = por %p37, %p38
      %p40 = scmp.ne.s32.totalorder %s29, %s30
      %p41 = scmp.eq.s32.totalorder %s21, 0
      %p42 = por %p40, %p41
      %p43 = scmp.ne.s32.totalorder %s29, %s30
      %p44 = scmp.eq.s32.totalorder %s22, 1
      %p45 = por %p43, %p44
      %p47 = scmp.ne.s32.totalorder %s30, %s46
      %p48 = scmp.eq.s32.totalorder %s22, 0
      %p49 = por %p47, %p48
      %s51 = sadd.s32 %s50, 1
      %p54 = scmp.eq.s32.totalorder %s16, 1
      %p55 = scmp.ne.s32.totalorder %s50, %s52
      %p56 = scmp.eq.s32.totalorder %s16, 0
      %p57 = por %p55, %p56
      %p58 = scmp.ne.s32.totalorder %s50, %s52
      %p59 = scmp.eq.s32.totalorder %s21, 1
      %p60 = por %p58, %p59
      %p61 = scmp.ne.s32.totalorder %s52, %s53
      %p62 = scmp.eq.s32.totalorder %s21, 0
      %p63 = por %p61, %p62
      %p64 = scmp.ne.s32.totalorder %s52, %s53
      %p65 = scmp.eq.s32.totalorder %s22, 1
      %p66 = por %p64, %p65
      %p68 = scmp.ne.s32.totalorder %s53, %s67
      %p69 = scmp.eq.s32.totalorder %s22, 0
      %p70 = por %p68, %p69
      %s72 = sadd.s32 %s71, 1
      %p75 = scmp.eq.s32.totalorder %s16, 1
      %p76 = scmp.ne.s32.totalorder %s71, %s73
      %p77 = scmp.eq.s32.totalorder %s16, 0
      %p78 = por %p76, %p77
      %p79 = scmp.ne.s32.totalorder %s71, %s73
      %p80 = scmp.eq.s32.totalorder %s21, 1
      %p81 = por %p79, %p80
      %p82 = scmp.ne.s32.totalorder %s73, %s74
      %p83 = scmp.eq.s32.totalorder %s21, 0
      %p84 = por %p82, %p83
      %p85 = scmp.ne.s32.totalorder %s73, %s74
      %p86 = scmp.eq.s32.totalorder %s22, 1
      %p87 = por %p85, %p86
      %p89 = scmp.ne.s32.totalorder %s74, %s88
      %p90 = scmp.eq.s32.totalorder %s22, 0
      %p91 = por %p89, %p90
      %s92 = ssub.s32 %s16, %s23
      %p93 = scmp.eq.s32.totalorder %s92, 0
      %s95 = sadd.s32 %s94, 1
      %s96 = scalar_select %p93, %s94, %s95
      %p99 = pneg %p93
      %p100 = scmp.eq.s32.totalorder %s16, 1
      %p101 = por %p99, %p100
      %p102 = scmp.ne.s32.totalorder %s94, %s97
      %p103 = scmp.eq.s32.totalorder %s16, 0
      %p104 = por %p102, %p103
      %p105 = scmp.ne.s32.totalorder %s94, %s97
      %p106 = scmp.eq.s32.totalorder %s21, 1
      %p107 = por %p105, %p106
      %p108 = scmp.ne.s32.totalorder %s97, %s98
      %p109 = scmp.eq.s32.totalorder %s21, 0
      %p110 = por %p108, %p109
      %p111 = scmp.ne.s32.totalorder %s97, %s98
      %p112 = scmp.eq.s32.totalorder %s22, 1
      %p113 = por %p111, %p112
      %p115 = scmp.ne.s32.totalorder %s98, %s114
      %p116 = scmp.eq.s32.totalorder %s22, 0
      %p117 = por %p115, %p116
      %p118 = scmp.le.s32.totalorder 1, %s16
      %p119 = scmp.lt.s32.totalorder %s16, 3
      %p120 = pnand %p118, %p119
      %p121 = pneg %p120
      // Predicated region
      $region9: #{tpu_custom_call.1} parent=5 // pred_check
        _
      $region10: #{tpu_custom_call.1} parent=5 // pred_check_branch
        %123 = sbr.rel (%p120) target = $region12
      $region11: #{tpu_custom_call.1} parent=5 // pred_region
        %s124 = ssub.s32 %s16, 1
        // Predicated region
        $region13: #{tpu_custom_call.1} parent=11 // pred_check
          %p125 = pneg %p63
        $region14: #{tpu_custom_call.1} parent=11 // pred_check_branch
          %127 = sbr.rel (%p125) target = $region16
        $region15: #{tpu_custom_call.1} parent=11 // pred_region
          %s129 = ssub.s32 1408, 1408
          %130 = vsyncadd [#allocation6], %s129
          %s131 = sshll.u32 [#allocation5], 4
          %s132 = int_to_ptr.vmem [resolvable:$true] %s131
          %137 = dma.hbm_to_vmem [thread:$0]  %s1, 1408, %s132, [#allocation6], 128, 128, 8
        $region16: #{tpu_custom_call.1} parent=11 // pred_fallthru
          _
        // Predicated region
        $region17: #{tpu_custom_call.1} parent=11 // pred_check
          %p138 = pneg %p84
        $region18: #{tpu_custom_call.1} parent=11 // pred_check_branch
          %140 = sbr.rel (%p138) target = $region20
        $region19: #{tpu_custom_call.1} parent=11 // pred_region
          %s142 = ssub.s32 1920, 1920
          %143 = vsyncadd [#allocation6], %s142
          %s144 = sshll.u32 [#allocation7], 4
          %s145 = int_to_ptr.vmem [resolvable:$true] %s144
          %150 = dma.hbm_to_vmem [thread:$0]  %s2, 1920, %s145, [#allocation6], 128, 128, 8
        $region20: #{tpu_custom_call.1} parent=11 // pred_fallthru
          _
      $region12: #{tpu_custom_call.1} parent=5 // pred_fallthru
        _
      %p151 = scmp.lt.s32.totalorder %s16, 2
      // Predicated region
      $region21: #{tpu_custom_call.1} parent=5 // pred_check
        %p152 = pneg %p151
      $region22: #{tpu_custom_call.1} parent=5 // pred_check_branch
        %154 = sbr.rel (%p152) target = $region24
      $region23: #{tpu_custom_call.1} parent=5 // pred_region
        // Predicated region
        $region25: #{tpu_custom_call.1} parent=23 // pred_check
          %p155 = pneg %p36
        $region26: #{tpu_custom_call.1} parent=23 // pred_check_branch
          %157 = sbr.rel (%p155) target = $region28
        $region27: #{tpu_custom_call.1} parent=23 // pred_region
          %s158 = sand.u32 %s26, 1
          %s159 = scalar_lea.sflag [#allocation3], %s158
          %s160 = sand.u32 %s26, 1
          %s161 = smul.addr %s160, 8
          %s162 = scalar_lea.vmem [#allocation2], %s161
          %s164 = ssub.s32 128, 128
          %165 = vsyncadd %s159, %s164
          %s166 = smul.addr %s16, 128
          %s167 = scalar_lea.hbm %s0, %s166
          %s169 = sshll.u32 %s162, 4
          %s170 = int_to_ptr.vmem [resolvable:$true] %s169
          %172 = dma.hbm_to_vmem [thread:$0]  %s167, 128, %s170, %s159
        $region28: #{tpu_custom_call.1} parent=23 // pred_fallthru
          _
      $region24: #{tpu_custom_call.1} parent=5 // pred_fallthru
        _
      %p173 = scmp.le.s32.totalorder 1, %s16
      %p174 = scmp.lt.s32.totalorder %s16, 3
      %p175 = pnand %p173, %p174
      %p176 = pneg %p175
      // Predicated region
      $region29: #{tpu_custom_call.1} parent=5 // pred_check
        _
      $region30: #{tpu_custom_call.1} parent=5 // pred_check_branch
        %178 = sbr.rel (%p175) target = $region32
      $region31: #{tpu_custom_call.1} parent=5 // pred_region
        %s179 = ssub.s32 %s16, 1
        %s180 = sand.u32 %s29, 1
        %s181 = scalar_lea.sflag [#allocation3], %s180
        %s182 = sand.u32 %s29, 1
        %s183 = smul.addr %s182, 8
        %s184 = scalar_lea.vmem [#allocation2], %s183
        // Predicated region
        $region33: #{tpu_custom_call.1} parent=31 // pred_check
          %p185 = pneg %p42
        $region34: #{tpu_custom_call.1} parent=31 // pred_check_branch
          %187 = sbr.rel (%p185) target = $region36
        $region35: #{tpu_custom_call.1} parent=31 // pred_region
          %188 = dma.done %s181, 128
        $region36: #{tpu_custom_call.1} parent=31 // pred_fallthru
          _
        // Predicated region
        $region37: #{tpu_custom_call.1} parent=31 // pred_check
          %p189 = pneg %p63
        $region38: #{tpu_custom_call.1} parent=31 // pred_check_branch
          %191 = sbr.rel (%p189) target = $region40
        $region39: #{tpu_custom_call.1} parent=31 // pred_region
          %192 = dma.done [#allocation6], 1408
        $region40: #{tpu_custom_call.1} parent=31 // pred_fallthru
          _
        // Predicated region
        $region41: #{tpu_custom_call.1} parent=31 // pred_check
          %p193 = pneg %p84
        $region42: #{tpu_custom_call.1} parent=31 // pred_check_branch
          %195 = sbr.rel (%p193) target = $region44
        $region43: #{tpu_custom_call.1} parent=31 // pred_region
          %196 = dma.done [#allocation6], 1920
        $region44: #{tpu_custom_call.1} parent=31 // pred_fallthru
          _
        %s197 = sand.u32 %s29, 1
        %s198 = scalar_lea.sflag [#allocation3], %s197
        %s199 = sand.u32 %s29, 1
        %s200 = smul.addr %s199, 8
        %s201 = scalar_lea.vmem [#allocation2], %s200
        %p202 = pneg %p42
        %p203 = pneg %p39
        %p204 = pneg %p63
        %p205 = pneg %p60
        %p206 = pneg %p84
        %p207 = pneg %p81
        %p208 = pneg %p110
        %p209 = pneg %p107
        %s210 = sand.u32 %s97, 1
        %s211 = scalar_lea.sflag [#allocation4], %s210
        %s212 = sand.u32 %s97, 1
        %s213 = smul.addr %s212, 8
        %s214 = scalar_lea.vmem [#allocation8], %s213
        %v215 = vld [vmem:[%s184] sm:$0xff]
        %v216 = vld [vmem:[#allocation5] sm:$0x1]
        %v217 = vld [vmem:[#allocation5 + $0x1] sm:$0x1]
        %v218 = vld [vmem:[#allocation5 + $0x2] sm:$0x1]
        %v219 = vld [vmem:[#allocation5 + $0x3] sm:$0x1]
        %v220 = vld [vmem:[#allocation5 + $0x4] sm:$0x1]
        %v221 = vld [vmem:[#allocation5 + $0x5] sm:$0x1]
        %v222 = vld [vmem:[#allocation5 + $0x6] sm:$0x1]
        %v223 = vld [vmem:[#allocation5 + $0x8] sm:$0xff]
        %v224 = vld [vmem:[#allocation5 + $0x10] sm:$0xff]
        %v225 = vld [vmem:[#allocation5 + $0x18] sm:$0xff]
        %v226 = vld [vmem:[#allocation5 + $0x20] sm:$0xff]
        %v227 = vld [vmem:[#allocation5 + $0x28] sm:$0xff]
        %v228 = vld [vmem:[#allocation5 + $0x30] sm:$0xff]
        %v229 = vld [vmem:[#allocation5 + $0x38] sm:$0xff]
        %v230 = vld [vmem:[#allocation5 + $0x40] sm:$0xff]
        %v231 = vld [vmem:[#allocation5 + $0x48] sm:$0xff]
        %v232 = vld [vmem:[#allocation5 + $0x50] sm:$0xff]
        %vm233 = vcmask 261120
        %v234 = vsel %vm233, %v215, 0.0
        %235 = vadd.xlane.f32.xlu0 %v234
        %v236 = vpop.xlane.xlu0 %235
        %v237 = vrcp.pop 32.0
        %v238 = vmul.f32 %v236, %v237
        %v239 = vmul.f32 %v215, %v215
        %v240 = vsel %vm233, %v239, 0.0
        %241 = vadd.xlane.f32.xlu0 %v240
        %v242 = vpop.xlane.xlu0 %241
        %v243 = vmul.f32 %v242, %v237
        %v244 = vmul.f32 %v238, %v238
        %v245 = vsub.f32 %v243, %v244
        %v246 = vsub.f32 %v215, %v238
        %v247 = vadd.f32 %v245, 1e-05
        %v248 = vrsqrt.pop %v247
        %v249 = vmul.f32 %v246, %v248
        %v250 = vlaneseq
        %v251 = vshrl.u32 %v250, 7
        %v252 = vsub.s32 0, %v251
        %v253 = vrot.slane %v216, %v252
        %v254 = vmul.f32 %v249, %v253
        %v255 = vlaneseq
        %v256 = vshrl.u32 %v255, 7
        %v257 = vsub.s32 0, %v256
        %v258 = vrot.slane %v217, %v257
        %v259 = vadd.f32 %v254, %v258
        %v260 = vlaneseq
        %v261 = vshrl.u32 %v260, 7
        %v262 = vsub.s32 0, %v261
        %v263 = vrot.slane %v218, %v262
        %v265 = vsel %vm233, %v259, 0
        %267 = vmatprep.subr.mxu0 0.0
        %268 = vmatpush1.msra.mxu0 %v223
        %269 = vmatprep.subr.mxu0 0.0
        %270 = vmatpush1.msra.mxu0 %v224
        %271 = vmatprep.subr.mxu0 0.0
        %272 = vmatpush1.msra.mxu0 %v225
        %273 = vmatprep.subr.mxu0 0.0
        %274 = vmatpush1.msra.mxu0 %v226
        %275 = vmatprep.subr.mxu0 0.0
        %276 = vmatpush1.msra.mxu0 0.0
        %277 = vmatprep.subr.mxu0 0.0
        %278 = vmatpush1.msra.mxu0 0.0
        %279 = vmatprep.subr.mxu0 0.0
        %280 = vmatpush1.msra.mxu0 0.0
        %281 = vmatprep.subr.mxu0 0.0
        %282 = vmatpush1.msra.mxu0 0.0
        %283 = vmatprep.subr.mxu0 0.0
        %284 = vmatpush1.msra.mxu0 0.0
        %285 = vmatprep.subr.mxu0 0.0
        %286 = vmatpush1.msra.mxu0 0.0
        %287 = vmatprep.subr.mxu0 0.0
        %288 = vmatpush1.msra.mxu0 0.0
        %289 = vmatprep.subr.mxu0 0.0
        %290 = vmatpush1.msra.mxu0 0.0
        %291 = vmatprep.subr.mxu0 0.0
        %292 = vmatpush1.msra.mxu0 0.0
        %293 = vmatprep.subr.mxu0 0.0
        %294 = vmatpush1.msra.mxu0 0.0
        %295 = vmatprep.subr.mxu0 0.0
        %296 = vmatpush1.msra.mxu0 0.0
        %297 = vmatprep.subr.mxu0 0.0
        %298 = vmatpush1.msra.mxu0 0.0
        %299 = vmatprep.subr.mxu0 0.0
        %300 = vmatpush1.msra.mxu0 0.0
        %301 = vmatprep.subr.mxu0 0.0
        %302 = vmatpush1.msra.mxu0 0.0
        %303 = vmatprep.subr.mxu0 0.0
        %304 = vmatpush1.msra.mxu0 0.0
        %305 = vmatprep.subr.mxu0 0.0
        %306 = vmatpush1.msra.mxu0 0.0
        %307 = vmatprep.subr.mxu0 0.0
        %308 = vmatpush1.msra.mxu0 0.0
        %309 = vmatprep.subr.mxu0 0.0
        %310 = vmatpush1.msra.mxu0 0.0
        %311 = vmatprep.subr.mxu0 0.0
        %312 = vmatpush1.msra.mxu0 0.0
        %313 = vmatprep.subr.mxu0 0.0
        %314 = vmatpush1.msra.mxu0 0.0
        %315 = vmatprep.subr.mxu0 0.0
        %316 = vmatpush1.msra.mxu0 0.0
        %317 = vmatprep.subr.mxu0 0.0
        %318 = vmatpush1.msra.mxu0 0.0
        %319 = vmatprep.subr.mxu0 0.0
        %320 = vmatpush1.msra.mxu0 0.0
        %321 = vmatprep.subr.mxu0 0.0
        %322 = vmatpush1.msra.mxu0 0.0
        %323 = vmatprep.subr.mxu0 0.0
        %324 = vmatpush1.msra.mxu0 0.0
        %325 = vmatprep.subr.mxu0 0.0
        %326 = vmatpush1.msra.mxu0 0.0
        %327 = vmatprep.subr.mxu0 0.0
        %328 = vmatpush1.msra.mxu0 0.0
        %329 = vmatprep.subr.mxu0 0.0
        %330 = vmatpush1.msra.mxu0 0.0
        %331 = vmatprep.mubr.f32.mxu0 0.0
        %332 = vmatmul.mubr.f32.gmra.mrb[0].mxu0 %v265
        %v333 = vpop.f32.mrb[0].mxu0
        %v334 = vadd.f32 %v263, %v333
        %v335 = vpop.f32.mrb[0].mxu0
        %336 = vdwg.mxu0
        %338 = vrot.lane.b32.xlu0 %v334, 112
        %v339 = vpop.permute.xlu0 %338
        %vm340 = vcmask 64512
        %v341 = vsel %vm340, %v334, 0
        %v343 = vsel %vm340, %v339, 0
        %345 = vmatprep.subr.mxu0 0.0
        %346 = vmatpush1.xpose.msra.mxu0 %v343
        %347 = vmatprep.subr.mxu0 0.0
        %348 = vmatpush1.xpose.msra.mxu0 0.0
        %349 = vmatprep.subr.mxu0 0.0
        %350 = vmatpush1.xpose.msra.mxu0 0.0
        %351 = vmatprep.subr.mxu0 0.0
        %352 = vmatpush1.xpose.msra.mxu0 0.0
        %353 = vmatprep.subr.mxu0 0.0
        %354 = vmatpush1.xpose.msra.mxu0 0.0
        %355 = vmatprep.subr.mxu0 0.0
        %356 = vmatpush1.xpose.msra.mxu0 0.0
        %357 = vmatprep.subr.mxu0 0.0
        %358 = vmatpush1.xpose.msra.mxu0 0.0
        %359 = vmatprep.subr.mxu0 0.0
        %360 = vmatpush1.xpose.msra.mxu0 0.0
        %361 = vmatprep.subr.mxu0 0.0
        %362 = vmatpush1.xpose.msra.mxu0 0.0
        %363 = vmatprep.subr.mxu0 0.0
        %364 = vmatpush1.xpose.msra.mxu0 0.0
        %365 = vmatprep.subr.mxu0 0.0
        %366 = vmatpush1.xpose.msra.mxu0 0.0
        %367 = vmatprep.subr.mxu0 0.0
        %368 = vmatpush1.xpose.msra.mxu0 0.0
        %369 = vmatprep.subr.mxu0 0.0
        %370 = vmatpush1.xpose.msra.mxu0 0.0
        %371 = vmatprep.subr.mxu0 0.0
        %372 = vmatpush1.xpose.msra.mxu0 0.0
        %373 = vmatprep.subr.mxu0 0.0
        %374 = vmatpush1.xpose.msra.mxu0 0.0
        %375 = vmatprep.subr.mxu0 0.0
        %376 = vmatpush1.xpose.msra.mxu0 0.0
        %377 = vmatprep.subr.mxu0 0.0
        %378 = vmatpush1.xpose.msra.mxu0 0.0
        %379 = vmatprep.subr.mxu0 0.0
        %380 = vmatpush1.xpose.msra.mxu0 0.0
        %381 = vmatprep.subr.mxu0 0.0
        %382 = vmatpush1.xpose.msra.mxu0 0.0
        %383 = vmatprep.subr.mxu0 0.0
        %384 = vmatpush1.xpose.msra.mxu0 0.0
        %385 = vmatprep.subr.mxu0 0.0
        %386 = vmatpush1.xpose.msra.mxu0 0.0
        %387 = vmatprep.subr.mxu0 0.0
        %388 = vmatpush1.xpose.msra.mxu0 0.0
        %389 = vmatprep.subr.mxu0 0.0
        %390 = vmatpush1.xpose.msra.mxu0 0.0
        %391 = vmatprep.subr.mxu0 0.0
        %392 = vmatpush1.xpose.msra.mxu0 0.0
        %393 = vmatprep.subr.mxu0 0.0
        %394 = vmatpush1.xpose.msra.mxu0 0.0
        %395 = vmatprep.subr.mxu0 0.0
        %396 = vmatpush1.xpose.msra.mxu0 0.0
        %397 = vmatprep.subr.mxu0 0.0
        %398 = vmatpush1.xpose.msra.mxu0 0.0
        %399 = vmatprep.subr.mxu0 0.0
        %400 = vmatpush1.xpose.msra.mxu0 0.0
        %401 = vmatprep.subr.mxu0 0.0
        %402 = vmatpush1.xpose.msra.mxu0 0.0
        %403 = vmatprep.subr.mxu0 0.0
        %404 = vmatpush1.xpose.msra.mxu0 0.0
        %405 = vmatprep.subr.mxu0 0.0
        %406 = vmatpush1.xpose.msra.mxu0 0.0
        %407 = vmatprep.subr.mxu0 0.0
        %408 = vmatpush1.xpose.msra.mxu0 0.0
        %409 = vmatprep.mubr.f32.mxu0 0.0
        %410 = vmatmul.mubr.f32.gmra.mrb[0].mxu0 %v341
        %v411 = vpop.f32.mrb[0].mxu0
        %v412 = vadd.f32 0.0, %v411
        %v413 = vpop.f32.mrb[0].mxu0
        %414 = vdwg.mxu0
        %v415 = vsel %vm340, %v412, -inf
        %416 = vmax.xlane.f32.xlu0 %v415
        %v417 = vpop.xlane.xlu0 %416
        %v418 = vsub.f32 %v412, %v417
        %v419 = vmul.f32 %v418, 1.442695
        %v420 = vpow.pop %v419
        %v421 = vsel %vm340, %v420, 0.0
        %422 = vadd.xlane.f32.xlu0 %v421
        %v423 = vpop.xlane.xlu0 %422
        %v424 = vrcp.pop %v423
        %v425 = vmul.f32 %v423, %v424
        %v426 = vsub.f32 2.0, %v425
        %v427 = vmul.f32 %v424, %v426
        %v428 = vmul.f32 %v420, %v427
        %429 = vrot.lane.b32.xlu0 %v334, 96
        %v430 = vpop.permute.xlu0 %429
        %v433 = vsel %vm340, %v428, 0
        %435 = vmatprep.subr.mxu0 0.0
        %436 = vmatpush1.msra.mxu0 %v430
        %437 = vmatprep.subr.mxu0 0.0
        %438 = vmatpush1.msra.mxu0 0.0
        %439 = vmatprep.subr.mxu0 0.0
        %440 = vmatpush1.msra.mxu0 0.0
        %441 = vmatprep.subr.mxu0 0.0
        %442 = vmatpush1.msra.mxu0 0.0
        %443 = vmatprep.subr.mxu0 0.0
        %444 = vmatpush1.msra.mxu0 0.0
        %445 = vmatprep.subr.mxu0 0.0
        %446 = vmatpush1.msra.mxu0 0.0
        %447 = vmatprep.subr.mxu0 0.0
        %448 = vmatpush1.msra.mxu0 0.0
        %449 = vmatprep.subr.mxu0 0.0
        %450 = vmatpush1.msra.mxu0 0.0
        %451 = vmatprep.subr.mxu0 0.0
        %452 = vmatpush1.msra.mxu0 0.0
        %453 = vmatprep.subr.mxu0 0.0
        %454 = vmatpush1.msra.mxu0 0.0
        %455 = vmatprep.subr.mxu0 0.0
        %456 = vmatpush1.msra.mxu0 0.0
        %457 = vmatprep.subr.mxu0 0.0
        %458 = vmatpush1.msra.mxu0 0.0
        %459 = vmatprep.subr.mxu0 0.0
        %460 = vmatpush1.msra.mxu0 0.0
        %461 = vmatprep.subr.mxu0 0.0
        %462 = vmatpush1.msra.mxu0 0.0
        %463 = vmatprep.subr.mxu0 0.0
        %464 = vmatpush1.msra.mxu0 0.0
        %465 = vmatprep.subr.mxu0 0.0
        %466 = vmatpush1.msra.mxu0 0.0
        %467 = vmatprep.subr.mxu0 0.0
        %468 = vmatpush1.msra.mxu0 0.0
        %469 = vmatprep.subr.mxu0 0.0
        %470 = vmatpush1.msra.mxu0 0.0
        %471 = vmatprep.subr.mxu0 0.0
        %472 = vmatpush1.msra.mxu0 0.0
        %473 = vmatprep.subr.mxu0 0.0
        %474 = vmatpush1.msra.mxu0 0.0
        %475 = vmatprep.subr.mxu0 0.0
        %476 = vmatpush1.msra.mxu0 0.0
        %477 = vmatprep.subr.mxu0 0.0
        %478 = vmatpush1.msra.mxu0 0.0
        %479 = vmatprep.subr.mxu0 0.0
        %480 = vmatpush1.msra.mxu0 0.0
        %481 = vmatprep.subr.mxu0 0.0
        %482 = vmatpush1.msra.mxu0 0.0
        %483 = vmatprep.subr.mxu0 0.0
        %484 = vmatpush1.msra.mxu0 0.0
        %485 = vmatprep.subr.mxu0 0.0
        %486 = vmatpush1.msra.mxu0 0.0
        %487 = vmatprep.subr.mxu0 0.0
        %488 = vmatpush1.msra.mxu0 0.0
        %489 = vmatprep.subr.mxu0 0.0
        %490 = vmatpush1.msra.mxu0 0.0
        %491 = vmatprep.subr.mxu0 0.0
        %492 = vmatpush1.msra.mxu0 0.0
        %493 = vmatprep.subr.mxu0 0.0
        %494 = vmatpush1.msra.mxu0 0.0
        %495 = vmatprep.subr.mxu0 0.0
        %496 = vmatpush1.msra.mxu0 0.0
        %497 = vmatprep.subr.mxu0 0.0
        %498 = vmatpush1.msra.mxu0 0.0
        %499 = vmatprep.mubr.f32.mxu0 0.0
        %500 = vmatmul.mubr.f32.gmra.mrb[0].mxu0 %v433
        %v501 = vpop.f32.mrb[0].mxu0
        %v502 = vadd.f32 0.0, %v501
        %v503 = vpop.f32.mrb[0].mxu0
        %504 = vdwg.mxu0
        %505 = vrot.lane.b32.xlu0 %v334, 120
        %v506 = vpop.permute.xlu0 %505
        %507 = vrot.lane.b32.xlu0 %v334, 104
        %v508 = vpop.permute.xlu0 %507
        %v509 = vsel %vm340, %v506, 0
        %v511 = vsel %vm340, %v508, 0
        %513 = vmatprep.subr.mxu0 0.0
        %514 = vmatpush1.xpose.msra.mxu0 %v511
        %515 = vmatprep.subr.mxu0 0.0
        %516 = vmatpush1.xpose.msra.mxu0 0.0
        %517 = vmatprep.subr.mxu0 0.0
        %518 = vmatpush1.xpose.msra.mxu0 0.0
        %519 = vmatprep.subr.mxu0 0.0
        %520 = vmatpush1.xpose.msra.mxu0 0.0
        %521 = vmatprep.subr.mxu0 0.0
        %522 = vmatpush1.xpose.msra.mxu0 0.0
        %523 = vmatprep.subr.mxu0 0.0
        %524 = vmatpush1.xpose.msra.mxu0 0.0
        %525 = vmatprep.subr.mxu0 0.0
        %526 = vmatpush1.xpose.msra.mxu0 0.0
        %527 = vmatprep.subr.mxu0 0.0
        %528 = vmatpush1.xpose.msra.mxu0 0.0
        %529 = vmatprep.subr.mxu0 0.0
        %530 = vmatpush1.xpose.msra.mxu0 0.0
        %531 = vmatprep.subr.mxu0 0.0
        %532 = vmatpush1.xpose.msra.mxu0 0.0
        %533 = vmatprep.subr.mxu0 0.0
        %534 = vmatpush1.xpose.msra.mxu0 0.0
        %535 = vmatprep.subr.mxu0 0.0
        %536 = vmatpush1.xpose.msra.mxu0 0.0
        %537 = vmatprep.subr.mxu0 0.0
        %538 = vmatpush1.xpose.msra.mxu0 0.0
        %539 = vmatprep.subr.mxu0 0.0
        %540 = vmatpush1.xpose.msra.mxu0 0.0
        %541 = vmatprep.subr.mxu0 0.0
        %542 = vmatpush1.xpose.msra.mxu0 0.0
        %543 = vmatprep.subr.mxu0 0.0
        %544 = vmatpush1.xpose.msra.mxu0 0.0
        %545 = vmatprep.subr.mxu0 0.0
        %546 = vmatpush1.xpose.msra.mxu0 0.0
        %547 = vmatprep.subr.mxu0 0.0
        %548 = vmatpush1.xpose.msra.mxu0 0.0
        %549 = vmatprep.subr.mxu0 0.0
        %550 = vmatpush1.xpose.msra.mxu0 0.0
        %551 = vmatprep.subr.mxu0 0.0
        %552 = vmatpush1.xpose.msra.mxu0 0.0
        %553 = vmatprep.subr.mxu0 0.0
        %554 = vmatpush1.xpose.msra.mxu0 0.0
        %555 = vmatprep.subr.mxu0 0.0
        %556 = vmatpush1.xpose.msra.mxu0 0.0
        %557 = vmatprep.subr.mxu0 0.0
        %558 = vmatpush1.xpose.msra.mxu0 0.0
        %559 = vmatprep.subr.mxu0 0.0
        %560 = vmatpush1.xpose.msra.mxu0 0.0
        %561 = vmatprep.subr.mxu0 0.0
        %562 = vmatpush1.xpose.msra.mxu0 0.0
        %563 = vmatprep.subr.mxu0 0.0
        %564 = vmatpush1.xpose.msra.mxu0 0.0
        %565 = vmatprep.subr.mxu0 0.0
        %566 = vmatpush1.xpose.msra.mxu0 0.0
        %567 = vmatprep.subr.mxu0 0.0
        %568 = vmatpush1.xpose.msra.mxu0 0.0
        %569 = vmatprep.subr.mxu0 0.0
        %570 = vmatpush1.xpose.msra.mxu0 0.0
        %571 = vmatprep.subr.mxu0 0.0
        %572 = vmatpush1.xpose.msra.mxu0 0.0
        %573 = vmatprep.subr.mxu0 0.0
        %574 = vmatpush1.xpose.msra.mxu0 0.0
        %575 = vmatprep.subr.mxu0 0.0
        %576 = vmatpush1.xpose.msra.mxu0 0.0
        %577 = vmatprep.mubr.f32.mxu0 0.0
        %578 = vmatmul.mubr.f32.gmra.mrb[0].mxu0 %v509
        %v579 = vpop.f32.mrb[0].mxu0
        %v580 = vadd.f32 0.0, %v579
        %v581 = vpop.f32.mrb[0].mxu0
        %582 = vdwg.mxu0
        %v583 = vsel %vm340, %v580, -inf
        %584 = vmax.xlane.f32.xlu0 %v583
        %v585 = vpop.xlane.xlu0 %584
        %v586 = vsub.f32 %v580, %v585
        %v587 = vmul.f32 %v586, 1.442695
        %v588 = vpow.pop %v587
        %v589 = vsel %vm340, %v588, 0.0
        %590 = vadd.xlane.f32.xlu0 %v589
        %v591 = vpop.xlane.xlu0 %590
        %v592 = vrcp.pop %v591
        %v593 = vmul.f32 %v591, %v592
        %v594 = vsub.f32 2.0, %v593
        %v595 = vmul.f32 %v592, %v594
        %v596 = vmul.f32 %v588, %v595
        %597 = vrot.lane.b32.xlu0 %v334, 88
        %v598 = vpop.permute.xlu0 %597
        %v601 = vsel %vm340, %v596, 0
        %603 = vmatprep.subr.mxu0 0.0
        %604 = vmatpush1.msra.mxu0 %v598
        %605 = vmatprep.subr.mxu0 0.0
        %606 = vmatpush1.msra.mxu0 0.0
        %607 = vmatprep.subr.mxu0 0.0
        %608 = vmatpush1.msra.mxu0 0.0
        %609 = vmatprep.subr.mxu0 0.0
        %610 = vmatpush1.msra.mxu0 0.0
        %611 = vmatprep.subr.mxu0 0.0
        %612 = vmatpush1.msra.mxu0 0.0
        %613 = vmatprep.subr.mxu0 0.0
        %614 = vmatpush1.msra.mxu0 0.0
        %615 = vmatprep.subr.mxu0 0.0
        %616 = vmatpush1.msra.mxu0 0.0
        %617 = vmatprep.subr.mxu0 0.0
        %618 = vmatpush1.msra.mxu0 0.0
        %619 = vmatprep.subr.mxu0 0.0
        %620 = vmatpush1.msra.mxu0 0.0
        %621 = vmatprep.subr.mxu0 0.0
        %622 = vmatpush1.msra.mxu0 0.0
        %623 = vmatprep.subr.mxu0 0.0
        %624 = vmatpush1.msra.mxu0 0.0
        %625 = vmatprep.subr.mxu0 0.0
        %626 = vmatpush1.msra.mxu0 0.0
        %627 = vmatprep.subr.mxu0 0.0
        %628 = vmatpush1.msra.mxu0 0.0
        %629 = vmatprep.subr.mxu0 0.0
        %630 = vmatpush1.msra.mxu0 0.0
        %631 = vmatprep.subr.mxu0 0.0
        %632 = vmatpush1.msra.mxu0 0.0
        %633 = vmatprep.subr.mxu0 0.0
        %634 = vmatpush1.msra.mxu0 0.0
        %635 = vmatprep.subr.mxu0 0.0
        %636 = vmatpush1.msra.mxu0 0.0
        %637 = vmatprep.subr.mxu0 0.0
        %638 = vmatpush1.msra.mxu0 0.0
        %639 = vmatprep.subr.mxu0 0.0
        %640 = vmatpush1.msra.mxu0 0.0
        %641 = vmatprep.subr.mxu0 0.0
        %642 = vmatpush1.msra.mxu0 0.0
        %643 = vmatprep.subr.mxu0 0.0
        %644 = vmatpush1.msra.mxu0 0.0
        %645 = vmatprep.subr.mxu0 0.0
        %646 = vmatpush1.msra.mxu0 0.0
        %647 = vmatprep.subr.mxu0 0.0
        %648 = vmatpush1.msra.mxu0 0.0
        %649 = vmatprep.subr.mxu0 0.0
        %650 = vmatpush1.msra.mxu0 0.0
        %651 = vmatprep.subr.mxu0 0.0
        %652 = vmatpush1.msra.mxu0 0.0
        %653 = vmatprep.subr.mxu0 0.0
        %654 = vmatpush1.msra.mxu0 0.0
        %655 = vmatprep.subr.mxu0 0.0
        %656 = vmatpush1.msra.mxu0 0.0
        %657 = vmatprep.subr.mxu0 0.0
        %658 = vmatpush1.msra.mxu0 0.0
        %659 = vmatprep.subr.mxu0 0.0
        %660 = vmatpush1.msra.mxu0 0.0
        %661 = vmatprep.subr.mxu0 0.0
        %662 = vmatpush1.msra.mxu0 0.0
        %663 = vmatprep.subr.mxu0 0.0
        %664 = vmatpush1.msra.mxu0 0.0
        %665 = vmatprep.subr.mxu0 0.0
        %666 = vmatpush1.msra.mxu0 0.0
        %667 = vmatprep.mubr.f32.mxu0 0.0
        %668 = vmatmul.mubr.f32.gmra.mrb[0].mxu0 %v601
        %v669 = vpop.f32.mrb[0].mxu0
        %v670 = vadd.f32 0.0, %v669
        %v671 = vpop.f32.mrb[0].mxu0
        %672 = vdwg.mxu0
        %674 = vrot.lane.b32.xlu0 %v670, 8
        %v675 = vpop.permute.xlu0 %674
        %v677 = vsel %vm340, %v502, %v675
        %vm678 = vcmask 130048
        %v680 = vsel %vm678, %v677, 0
        %682 = vmatprep.subr.mxu0 0.0
        %683 = vmatpush1.msra.mxu0 %v227
        %684 = vmatprep.subr.mxu0 0.0
        %685 = vmatpush1.msra.mxu0 %v228
        %686 = vmatprep.subr.mxu0 0.0
        %687 = vmatpush1.msra.mxu0 0.0
        %688 = vmatprep.subr.mxu0 0.0
        %689 = vmatpush1.msra.mxu0 0.0
        %690 = vmatprep.subr.mxu0 0.0
        %691 = vmatpush1.msra.mxu0 0.0
        %692 = vmatprep.subr.mxu0 0.0
        %693 = vmatpush1.msra.mxu0 0.0
        %694 = vmatprep.subr.mxu0 0.0
        %695 = vmatpush1.msra.mxu0 0.0
        %696 = vmatprep.subr.mxu0 0.0
        %697 = vmatpush1.msra.mxu0 0.0
        %698 = vmatprep.subr.mxu0 0.0
        %699 = vmatpush1.msra.mxu0 0.0
        %700 = vmatprep.subr.mxu0 0.0
        %701 = vmatpush1.msra.mxu0 0.0
        %702 = vmatprep.subr.mxu0 0.0
        %703 = vmatpush1.msra.mxu0 0.0
        %704 = vmatprep.subr.mxu0 0.0
        %705 = vmatpush1.msra.mxu0 0.0
        %706 = vmatprep.subr.mxu0 0.0
        %707 = vmatpush1.msra.mxu0 0.0
        %708 = vmatprep.subr.mxu0 0.0
        %709 = vmatpush1.msra.mxu0 0.0
        %710 = vmatprep.subr.mxu0 0.0
        %711 = vmatpush1.msra.mxu0 0.0
        %712 = vmatprep.subr.mxu0 0.0
        %713 = vmatpush1.msra.mxu0 0.0
        %714 = vmatprep.subr.mxu0 0.0
        %715 = vmatpush1.msra.mxu0 0.0
        %716 = vmatprep.subr.mxu0 0.0
        %717 = vmatpush1.msra.mxu0 0.0
        %718 = vmatprep.subr.mxu0 0.0
        %719 = vmatpush1.msra.mxu0 0.0
        %720 = vmatprep.subr.mxu0 0.0
        %721 = vmatpush1.msra.mxu0 0.0
        %722 = vmatprep.subr.mxu0 0.0
        %723 = vmatpush1.msra.mxu0 0.0
        %724 = vmatprep.subr.mxu0 0.0
        %725 = vmatpush1.msra.mxu0 0.0
        %726 = vmatprep.subr.mxu0 0.0
        %727 = vmatpush1.msra.mxu0 0.0
        %728 = vmatprep.subr.mxu0 0.0
        %729 = vmatpush1.msra.mxu0 0.0
        %730 = vmatprep.subr.mxu0 0.0
        %731 = vmatpush1.msra.mxu0 0.0
        %732 = vmatprep.subr.mxu0 0.0
        %733 = vmatpush1.msra.mxu0 0.0
        %734 = vmatprep.subr.mxu0 0.0
        %735 = vmatpush1.msra.mxu0 0.0
        %736 = vmatprep.subr.mxu0 0.0
        %737 = vmatpush1.msra.mxu0 0.0
        %738 = vmatprep.subr.mxu0 0.0
        %739 = vmatpush1.msra.mxu0 0.0
        %740 = vmatprep.subr.mxu0 0.0
        %741 = vmatpush1.msra.mxu0 0.0
        %742 = vmatprep.subr.mxu0 0.0
        %743 = vmatpush1.msra.mxu0 0.0
        %744 = vmatprep.subr.mxu0 0.0
        %745 = vmatpush1.msra.mxu0 0.0
        %746 = vmatprep.mubr.f32.mxu0 0.0
        %747 = vmatmul.mubr.f32.gmra.mrb[0].mxu0 %v680
        %v748 = vpop.f32.mrb[0].mxu0
        %v749 = vadd.f32 0.0, %v748
        %v750 = vpop.f32.mrb[0].mxu0
        %751 = vdwg.mxu0
        %v752 = vadd.f32 %v215, %v749
        %v753 = vlaneseq
        %v754 = vshrl.u32 %v753, 7
        %v755 = vsub.s32 0, %v754
        %v756 = vrot.slane %v219, %v755
        %v757 = vadd.f32 %v752, %v756
        %v758 = vsel %vm233, %v757, 0.0
        %759 = vadd.xlane.f32.xlu0 %v758
        %v760 = vpop.xlane.xlu0 %759
        %v761 = vmul.f32 %v760, %v237
        %v762 = vmul.f32 %v757, %v757
        %v763 = vsel %vm233, %v762, 0.0
        %764 = vadd.xlane.f32.xlu0 %v763
        %v765 = vpop.xlane.xlu0 %764
        %v766 = vmul.f32 %v765, %v237
        %v767 = vmul.f32 %v761, %v761
        %v768 = vsub.f32 %v766, %v767
        %v769 = vsub.f32 %v757, %v761
        %v770 = vadd.f32 %v768, 1e-05
        %v771 = vrsqrt.pop %v770
        %v772 = vmul.f32 %v769, %v771
        %v773 = vlaneseq
        %v774 = vshrl.u32 %v773, 7
        %v775 = vsub.s32 0, %v774
        %v776 = vrot.slane %v220, %v775
        %v777 = vmul.f32 %v772, %v776
        %v778 = vlaneseq
        %v779 = vshrl.u32 %v778, 7
        %v780 = vsub.s32 0, %v779
        %v781 = vrot.slane %v221, %v780
        %v782 = vadd.f32 %v777, %v781
        %v783 = vlaneseq
        %v784 = vshrl.u32 %v783, 7
        %v785 = vsub.s32 0, %v784
        %v786 = vrot.slane %v222, %v785
        %v788 = vsel %vm233, %v782, 0
        %790 = vmatprep.subr.mxu0 0.0
        %791 = vmatpush1.msra.mxu0 %v229
        %792 = vmatprep.subr.mxu0 0.0
        %793 = vmatpush1.msra.mxu0 %v230
        %794 = vmatprep.subr.mxu0 0.0
        %795 = vmatpush1.msra.mxu0 %v231
        %796 = vmatprep.subr.mxu0 0.0
        %797 = vmatpush1.msra.mxu0 %v232
        %798 = vmatprep.subr.mxu0 0.0
        %799 = vmatpush1.msra.mxu0 0.0
        %800 = vmatprep.subr.mxu0 0.0
        %801 = vmatpush1.msra.mxu0 0.0
        %802 = vmatprep.subr.mxu0 0.0
        %803 = vmatpush1.msra.mxu0 0.0
        %804 = vmatprep.subr.mxu0 0.0
        %805 = vmatpush1.msra.mxu0 0.0
        %806 = vmatprep.subr.mxu0 0.0
        %807 = vmatpush1.msra.mxu0 0.0
        %808 = vmatprep.subr.mxu0 0.0
        %809 = vmatpush1.msra.mxu0 0.0
        %810 = vmatprep.subr.mxu0 0.0
        %811 = vmatpush1.msra.mxu0 0.0
        %812 = vmatprep.subr.mxu0 0.0
        %813 = vmatpush1.msra.mxu0 0.0
        %814 = vmatprep.subr.mxu0 0.0
        %815 = vmatpush1.msra.mxu0 0.0
        %816 = vmatprep.subr.mxu0 0.0
        %817 = vmatpush1.msra.mxu0 0.0
        %818 = vmatprep.subr.mxu0 0.0
        %819 = vmatpush1.msra.mxu0 0.0
        %820 = vmatprep.subr.mxu0 0.0
        %821 = vmatpush1.msra.mxu0 0.0
        %822 = vmatprep.subr.mxu0 0.0
        %823 = vmatpush1.msra.mxu0 0.0
        %824 = vmatprep.subr.mxu0 0.0
        %825 = vmatpush1.msra.mxu0 0.0
        %826 = vmatprep.subr.mxu0 0.0
        %827 = vmatpush1.msra.mxu0 0.0
        %828 = vmatprep.subr.mxu0 0.0
        %829 = vmatpush1.msra.mxu0 0.0
        %830 = vmatprep.subr.mxu0 0.0
        %831 = vmatpush1.msra.mxu0 0.0
        %832 = vmatprep.subr.mxu0 0.0
        %833 = vmatpush1.msra.mxu0 0.0
        %834 = vmatprep.subr.mxu0 0.0
        %835 = vmatpush1.msra.mxu0 0.0
        %836 = vmatprep.subr.mxu0 0.0
        %837 = vmatpush1.msra.mxu0 0.0
        %838 = vmatprep.subr.mxu0 0.0
        %839 = vmatpush1.msra.mxu0 0.0
        %840 = vmatprep.subr.mxu0 0.0
        %841 = vmatpush1.msra.mxu0 0.0
        %842 = vmatprep.subr.mxu0 0.0
        %843 = vmatpush1.msra.mxu0 0.0
        %844 = vmatprep.subr.mxu0 0.0
        %845 = vmatpush1.msra.mxu0 0.0
        %846 = vmatprep.subr.mxu0 0.0
        %847 = vmatpush1.msra.mxu0 0.0
        %848 = vmatprep.subr.mxu0 0.0
        %849 = vmatpush1.msra.mxu0 0.0
        %850 = vmatprep.subr.mxu0 0.0
        %851 = vmatpush1.msra.mxu0 0.0
        %852 = vmatprep.subr.mxu0 0.0
        %853 = vmatpush1.msra.mxu0 0.0
        %854 = vmatprep.mubr.f32.mxu0 0.0
        %855 = vmatmul.mubr.f32.gmra.mrb[0].mxu0 %v788
        %v856 = vpop.f32.mrb[0].mxu0
        %v857 = vadd.f32 %v786, %v856
        %v858 = vpop.f32.mrb[0].mxu0
        %859 = vdwg.mxu0
        %v860 = vmul.f32 %v857, 0.5
        %v861 = vmul.f32 %v857, 0.70710677
        %vm862 = vcmp.ge.f32.partialorder %v861, 0.0
        %v863 = vsel %vm862, 1.0, -1.0
        %v864 = vand.u32 2147483647, %v861
        %v865 = vmul.f32 %v864, 0.3275911
        %v866 = vadd.f32 %v865, 1.0
        %v867 = vrcp.pop %v866
        %v868 = vmul.f32 1.0, %v867
        %v869 = vmul.f32 %v868, 1.0614054
        %v870 = vadd.f32 %v869, -1.4531521
        %v871 = vmul.f32 %v870, %v868
        %v872 = vadd.f32 %v871, 1.4214138
        %v873 = vmul.f32 %v872, %v868
        %v874 = vadd.f32 %v873, -0.28449672
        %v875 = vmul.f32 %v874, %v868
        %v876 = vadd.f32 %v875, 0.2548296
        %v877 = vmul.f32 %v876, %v868
        %v878 = vsub.f32 0.0, %v864
        %v879 = vmul.f32 %v878, %v864
        %v880 = vmul.f32 %v879, 1.442695
        %v881 = vpow.pop %v880
        %v882 = vmul.f32 %v877, %v881
        %v883 = vsub.f32 1.0, %v882
        %v884 = vmul.f32 %v863, %v883
        %v885 = vadd.f32 %v884, 1.0
        %v886 = vmul.f32 %v860, %v885
        %v887 = vadd.f32 %v886, %v757
        %v888 = vld [vmem:[#allocation7] sm:$0x1]
        %v889 = vld [vmem:[#allocation7 + $0x1] sm:$0x1]
        %v890 = vld [vmem:[#allocation7 + $0x2] sm:$0x1]
        %v891 = vld [vmem:[#allocation7 + $0x3] sm:$0x1]
        %v892 = vld [vmem:[#allocation7 + $0x4] sm:$0x1]
        %v893 = vld [vmem:[#allocation7 + $0x5] sm:$0x1]
        %v894 = vld [vmem:[#allocation7 + $0x6] sm:$0x1]
        %v895 = vld [vmem:[#allocation7 + $0x8] sm:$0xff]
        %v896 = vld [vmem:[#allocation7 + $0x10] sm:$0xff]
        %v897 = vld [vmem:[#allocation7 + $0x18] sm:$0xff]
        %v898 = vld [vmem:[#allocation7 + $0x20] sm:$0xff]
        %v899 = vld [vmem:[#allocation7 + $0x28] sm:$0xff]
        %v900 = vld [vmem:[#allocation7 + $0x30] sm:$0xff]
        %v901 = vld [vmem:[#allocation7 + $0x38] sm:$0xff]
        %v902 = vld [vmem:[#allocation7 + $0x40] sm:$0xff]
        %v903 = vld [vmem:[#allocation7 + $0x48] sm:$0xff]
        %v904 = vld [vmem:[#allocation7 + $0x50] sm:$0xff]
        %v905 = vsel %vm233, %v887, 0.0
        %906 = vadd.xlane.f32.xlu0 %v905
        %v907 = vpop.xlane.xlu0 %906
        %v908 = vmul.f32 %v907, %v237
        %v909 = vmul.f32 %v887, %v887
        %v910 = vsel %vm233, %v909, 0.0
        %911 = vadd.xlane.f32.xlu0 %v910
        %v912 = vpop.xlane.xlu0 %911
        %v913 = vmul.f32 %v912, %v237
        %v914 = vmul.f32 %v908, %v908
        %v915 = vsub.f32 %v913, %v914
        %v916 = vsub.f32 %v887, %v908
        %v917 = vadd.f32 %v915, 1e-05
        %v918 = vrsqrt.pop %v917
        %v919 = vmul.f32 %v916, %v918
        %v920 = vlaneseq
        %v921 = vshrl.u32 %v920, 7
        %v922 = vsub.s32 0, %v921
        %v923 = vrot.slane %v888, %v922
        %v924 = vmul.f32 %v919, %v923
        %v925 = vlaneseq
        %v926 = vshrl.u32 %v925, 7
        %v927 = vsub.s32 0, %v926
        %v928 = vrot.slane %v889, %v927
        %v929 = vadd.f32 %v924, %v928
        %v930 = vlaneseq
        %v931 = vshrl.u32 %v930, 7
        %v932 = vsub.s32 0, %v931
        %v933 = vrot.slane %v890, %v932
        %v935 = vsel %vm233, %v929, 0
        %937 = vmatprep.subr.mxu0 0.0
        %938 = vmatpush1.msra.mxu0 %v895
        %939 = vmatprep.subr.mxu0 0.0
        %940 = vmatpush1.msra.mxu0 %v896
        %941 = vmatprep.subr.mxu0 0.0
        %942 = vmatpush1.msra.mxu0 %v897
        %943 = vmatprep.subr.mxu0 0.0
        %944 = vmatpush1.msra.mxu0 %v898
        %945 = vmatprep.subr.mxu0 0.0
        %946 = vmatpush1.msra.mxu0 0.0
        %947 = vmatprep.subr.mxu0 0.0
        %948 = vmatpush1.msra.mxu0 0.0
        %949 = vmatprep.subr.mxu0 0.0
        %950 = vmatpush1.msra.mxu0 0.0
        %951 = vmatprep.subr.mxu0 0.0
        %952 = vmatpush1.msra.mxu0 0.0
        %953 = vmatprep.subr.mxu0 0.0
        %954 = vmatpush1.msra.mxu0 0.0
        %955 = vmatprep.subr.mxu0 0.0
        %956 = vmatpush1.msra.mxu0 0.0
        %957 = vmatprep.subr.mxu0 0.0
        %958 = vmatpush1.msra.mxu0 0.0
        %959 = vmatprep.subr.mxu0 0.0
        %960 = vmatpush1.msra.mxu0 0.0
        %961 = vmatprep.subr.mxu0 0.0
        %962 = vmatpush1.msra.mxu0 0.0
        %963 = vmatprep.subr.mxu0 0.0
        %964 = vmatpush1.msra.mxu0 0.0
        %965 = vmatprep.subr.mxu0 0.0
        %966 = vmatpush1.msra.mxu0 0.0
        %967 = vmatprep.subr.mxu0 0.0
        %968 = vmatpush1.msra.mxu0 0.0
        %969 = vmatprep.subr.mxu0 0.0
        %970 = vmatpush1.msra.mxu0 0.0
        %971 = vmatprep.subr.mxu0 0.0
        %972 = vmatpush1.msra.mxu0 0.0
        %973 = vmatprep.subr.mxu0 0.0
        %974 = vmatpush1.msra.mxu0 0.0
        %975 = vmatprep.subr.mxu0 0.0
        %976 = vmatpush1.msra.mxu0 0.0
        %977 = vmatprep.subr.mxu0 0.0
        %978 = vmatpush1.msra.mxu0 0.0
        %979 = vmatprep.subr.mxu0 0.0
        %980 = vmatpush1.msra.mxu0 0.0
        %981 = vmatprep.subr.mxu0 0.0
        %982 = vmatpush1.msra.mxu0 0.0
        %983 = vmatprep.subr.mxu0 0.0
        %984 = vmatpush1.msra.mxu0 0.0
        %985 = vmatprep.subr.mxu0 0.0
        %986 = vmatpush1.msra.mxu0 0.0
        %987 = vmatprep.subr.mxu0 0.0
        %988 = vmatpush1.msra.mxu0 0.0
        %989 = vmatprep.subr.mxu0 0.0
        %990 = vmatpush1.msra.mxu0 0.0
        %991 = vmatprep.subr.mxu0 0.0
        %992 = vmatpush1.msra.mxu0 0.0
        %993 = vmatprep.subr.mxu0 0.0
        %994 = vmatpush1.msra.mxu0 0.0
        %995 = vmatprep.subr.mxu0 0.0
        %996 = vmatpush1.msra.mxu0 0.0
        %997 = vmatprep.subr.mxu0 0.0
        %998 = vmatpush1.msra.mxu0 0.0
        %999 = vmatprep.subr.mxu0 0.0
        %1000 = vmatpush1.msra.mxu0 0.0
        %1001 = vmatprep.mubr.f32.mxu0 0.0
        %1002 = vmatmul.mubr.f32.gmra.mrb[0].mxu0 %v935
        %v1003 = vpop.f32.mrb[0].mxu0
        %v1004 = vadd.f32 %v933, %v1003
        %v1005 = vpop.f32.mrb[0].mxu0
        %1006 = vdwg.mxu0
        %1008 = vrot.lane.b32.xlu0 %v1004, 112
        %v1009 = vpop.permute.xlu0 %1008
        %v1010 = vsel %vm340, %v1004, 0
        %v1012 = vsel %vm340, %v1009, 0
        %1014 = vmatprep.subr.mxu0 0.0
        %1015 = vmatpush1.xpose.msra.mxu0 %v1012
        %1016 = vmatprep.subr.mxu0 0.0
        %1017 = vmatpush1.xpose.msra.mxu0 0.0
        %1018 = vmatprep.subr.mxu0 0.0
        %1019 = vmatpush1.xpose.msra.mxu0 0.0
        %1020 = vmatprep.subr.mxu0 0.0
        %1021 = vmatpush1.xpose.msra.mxu0 0.0
        %1022 = vmatprep.subr.mxu0 0.0
        %1023 = vmatpush1.xpose.msra.mxu0 0.0
        %1024 = vmatprep.subr.mxu0 0.0
        %1025 = vmatpush1.xpose.msra.mxu0 0.0
        %1026 = vmatprep.subr.mxu0 0.0
        %1027 = vmatpush1.xpose.msra.mxu0 0.0
        %1028 = vmatprep.subr.mxu0 0.0
        %1029 = vmatpush1.xpose.msra.mxu0 0.0
        %1030 = vmatprep.subr.mxu0 0.0
        %1031 = vmatpush1.xpose.msra.mxu0 0.0
        %1032 = vmatprep.subr.mxu0 0.0
        %1033 = vmatpush1.xpose.msra.mxu0 0.0
        %1034 = vmatprep.subr.mxu0 0.0
        %1035 = vmatpush1.xpose.msra.mxu0 0.0
        %1036 = vmatprep.subr.mxu0 0.0
        %1037 = vmatpush1.xpose.msra.mxu0 0.0
        %1038 = vmatprep.subr.mxu0 0.0
        %1039 = vmatpush1.xpose.msra.mxu0 0.0
        %1040 = vmatprep.subr.mxu0 0.0
        %1041 = vmatpush1.xpose.msra.mxu0 0.0
        %1042 = vmatprep.subr.mxu0 0.0
        %1043 = vmatpush1.xpose.msra.mxu0 0.0
        %1044 = vmatprep.subr.mxu0 0.0
        %1045 = vmatpush1.xpose.msra.mxu0 0.0
        %1046 = vmatprep.subr.mxu0 0.0
        %1047 = vmatpush1.xpose.msra.mxu0 0.0
        %1048 = vmatprep.subr.mxu0 0.0
        %1049 = vmatpush1.xpose.msra.mxu0 0.0
        %1050 = vmatprep.subr.mxu0 0.0
        %1051 = vmatpush1.xpose.msra.mxu0 0.0
        %1052 = vmatprep.subr.mxu0 0.0
        %1053 = vmatpush1.xpose.msra.mxu0 0.0
        %1054 = vmatprep.subr.mxu0 0.0
        %1055 = vmatpush1.xpose.msra.mxu0 0.0
        %1056 = vmatprep.subr.mxu0 0.0
        %1057 = vmatpush1.xpose.msra.mxu0 0.0
        %1058 = vmatprep.subr.mxu0 0.0
        %1059 = vmatpush1.xpose.msra.mxu0 0.0
        %1060 = vmatprep.subr.mxu0 0.0
        %1061 = vmatpush1.xpose.msra.mxu0 0.0
        %1062 = vmatprep.subr.mxu0 0.0
        %1063 = vmatpush1.xpose.msra.mxu0 0.0
        %1064 = vmatprep.subr.mxu0 0.0
        %1065 = vmatpush1.xpose.msra.mxu0 0.0
        %1066 = vmatprep.subr.mxu0 0.0
        %1067 = vmatpush1.xpose.msra.mxu0 0.0
        %1068 = vmatprep.subr.mxu0 0.0
        %1069 = vmatpush1.xpose.msra.mxu0 0.0
        %1070 = vmatprep.subr.mxu0 0.0
        %1071 = vmatpush1.xpose.msra.mxu0 0.0
        %1072 = vmatprep.subr.mxu0 0.0
        %1073 = vmatpush1.xpose.msra.mxu0 0.0
        %1074 = vmatprep.subr.mxu0 0.0
        %1075 = vmatpush1.xpose.msra.mxu0 0.0
        %1076 = vmatprep.subr.mxu0 0.0
        %1077 = vmatpush1.xpose.msra.mxu0 0.0
        %1078 = vmatprep.mubr.f32.mxu0 0.0
        %1079 = vmatmul.mubr.f32.gmra.mrb[0].mxu0 %v1010
        %v1080 = vpop.f32.mrb[0].mxu0
        %v1081 = vadd.f32 0.0, %v1080
        %v1082 = vpop.f32.mrb[0].mxu0
        %1083 = vdwg.mxu0
        %v1084 = vsel %vm340, %v1081, -inf
        %1085 = vmax.xlane.f32.xlu0 %v1084
        %v1086 = vpop.xlane.xlu0 %1085
        %v1087 = vsub.f32 %v1081, %v1086
        %v1088 = vmul.f32 %v1087, 1.442695
        %v1089 = vpow.pop %v1088
        %v1090 = vsel %vm340, %v1089, 0.0
        %1091 = vadd.xlane.f32.xlu0 %v1090
        %v1092 = vpop.xlane.xlu0 %1091
        %v1093 = vrcp.pop %v1092
        %v1094 = vmul.f32 %v1092, %v1093
        %v1095 = vsub.f32 2.0, %v1094
        %v1096 = vmul.f32 %v1093, %v1095
        %v1097 = vmul.f32 %v1089, %v1096
        %1098 = vrot.lane.b32.xlu0 %v1004, 96
        %v1099 = vpop.permute.xlu0 %1098
        %v1102 = vsel %vm340, %v1097, 0
        %1104 = vmatprep.subr.mxu0 0.0
        %1105 = vmatpush1.msra.mxu0 %v1099
        %1106 = vmatprep.subr.mxu0 0.0
        %1107 = vmatpush1.msra.mxu0 0.0
        %1108 = vmatprep.subr.mxu0 0.0
        %1109 = vmatpush1.msra.mxu0 0.0
        %1110 = vmatprep.subr.mxu0 0.0
        %1111 = vmatpush1.msra.mxu0 0.0
        %1112 = vmatprep.subr.mxu0 0.0
        %1113 = vmatpush1.msra.mxu0 0.0
        %1114 = vmatprep.subr.mxu0 0.0
        %1115 = vmatpush1.msra.mxu0 0.0
        %1116 = vmatprep.subr.mxu0 0.0
        %1117 = vmatpush1.msra.mxu0 0.0
        %1118 = vmatprep.subr.mxu0 0.0
        %1119 = vmatpush1.msra.mxu0 0.0
        %1120 = vmatprep.subr.mxu0 0.0
        %1121 = vmatpush1.msra.mxu0 0.0
        %1122 = vmatprep.subr.mxu0 0.0
        %1123 = vmatpush1.msra.mxu0 0.0
        %1124 = vmatprep.subr.mxu0 0.0
        %1125 = vmatpush1.msra.mxu0 0.0
        %1126 = vmatprep.subr.mxu0 0.0
        %1127 = vmatpush1.msra.mxu0 0.0
        %1128 = vmatprep.subr.mxu0 0.0
        %1129 = vmatpush1.msra.mxu0 0.0
        %1130 = vmatprep.subr.mxu0 0.0
        %1131 = vmatpush1.msra.mxu0 0.0
        %1132 = vmatprep.subr.mxu0 0.0
        %1133 = vmatpush1.msra.mxu0 0.0
        %1134 = vmatprep.subr.mxu0 0.0
        %1135 = vmatpush1.msra.mxu0 0.0
        %1136 = vmatprep.subr.mxu0 0.0
        %1137 = vmatpush1.msra.mxu0 0.0
        %1138 = vmatprep.subr.mxu0 0.0
        %1139 = vmatpush1.msra.mxu0 0.0
        %1140 = vmatprep.subr.mxu0 0.0
        %1141 = vmatpush1.msra.mxu0 0.0
        %1142 = vmatprep.subr.mxu0 0.0
        %1143 = vmatpush1.msra.mxu0 0.0
        %1144 = vmatprep.subr.mxu0 0.0
        %1145 = vmatpush1.msra.mxu0 0.0
        %1146 = vmatprep.subr.mxu0 0.0
        %1147 = vmatpush1.msra.mxu0 0.0
        %1148 = vmatprep.subr.mxu0 0.0
        %1149 = vmatpush1.msra.mxu0 0.0
        %1150 = vmatprep.subr.mxu0 0.0
        %1151 = vmatpush1.msra.mxu0 0.0
        %1152 = vmatprep.subr.mxu0 0.0
        %1153 = vmatpush1.msra.mxu0 0.0
        %1154 = vmatprep.subr.mxu0 0.0
        %1155 = vmatpush1.msra.mxu0 0.0
        %1156 = vmatprep.subr.mxu0 0.0
        %1157 = vmatpush1.msra.mxu0 0.0
        %1158 = vmatprep.subr.mxu0 0.0
        %1159 = vmatpush1.msra.mxu0 0.0
        %1160 = vmatprep.subr.mxu0 0.0
        %1161 = vmatpush1.msra.mxu0 0.0
        %1162 = vmatprep.subr.mxu0 0.0
        %1163 = vmatpush1.msra.mxu0 0.0
        %1164 = vmatprep.subr.mxu0 0.0
        %1165 = vmatpush1.msra.mxu0 0.0
        %1166 = vmatprep.subr.mxu0 0.0
        %1167 = vmatpush1.msra.mxu0 0.0
        %1168 = vmatprep.mubr.f32.mxu0 0.0
        %1169 = vmatmul.mubr.f32.gmra.mrb[0].mxu0 %v1102
        %v1170 = vpop.f32.mrb[0].mxu0
        %v1171 = vadd.f32 0.0, %v1170
        %v1172 = vpop.f32.mrb[0].mxu0
        %1173 = vdwg.mxu0
        %1174 = vrot.lane.b32.xlu0 %v1004, 120
        %v1175 = vpop.permute.xlu0 %1174
        %1176 = vrot.lane.b32.xlu0 %v1004, 104
        %v1177 = vpop.permute.xlu0 %1176
        %v1178 = vsel %vm340, %v1175, 0
        %v1180 = vsel %vm340, %v1177, 0
        %1182 = vmatprep.subr.mxu0 0.0
        %1183 = vmatpush1.xpose.msra.mxu0 %v1180
        %1184 = vmatprep.subr.mxu0 0.0
        %1185 = vmatpush1.xpose.msra.mxu0 0.0
        %1186 = vmatprep.subr.mxu0 0.0
        %1187 = vmatpush1.xpose.msra.mxu0 0.0
        %1188 = vmatprep.subr.mxu0 0.0
        %1189 = vmatpush1.xpose.msra.mxu0 0.0
        %1190 = vmatprep.subr.mxu0 0.0
        %1191 = vmatpush1.xpose.msra.mxu0 0.0
        %1192 = vmatprep.subr.mxu0 0.0
        %1193 = vmatpush1.xpose.msra.mxu0 0.0
        %1194 = vmatprep.subr.mxu0 0.0
        %1195 = vmatpush1.xpose.msra.mxu0 0.0
        %1196 = vmatprep.subr.mxu0 0.0
        %1197 = vmatpush1.xpose.msra.mxu0 0.0
        %1198 = vmatprep.subr.mxu0 0.0
        %1199 = vmatpush1.xpose.msra.mxu0 0.0
        %1200 = vmatprep.subr.mxu0 0.0
        %1201 = vmatpush1.xpose.msra.mxu0 0.0
        %1202 = vmatprep.subr.mxu0 0.0
        %1203 = vmatpush1.xpose.msra.mxu0 0.0
        %1204 = vmatprep.subr.mxu0 0.0
        %1205 = vmatpush1.xpose.msra.mxu0 0.0
        %1206 = vmatprep.subr.mxu0 0.0
        %1207 = vmatpush1.xpose.msra.mxu0 0.0
        %1208 = vmatprep.subr.mxu0 0.0
        %1209 = vmatpush1.xpose.msra.mxu0 0.0
        %1210 = vmatprep.subr.mxu0 0.0
        %1211 = vmatpush1.xpose.msra.mxu0 0.0
        %1212 = vmatprep.subr.mxu0 0.0
        %1213 = vmatpush1.xpose.msra.mxu0 0.0
        %1214 = vmatprep.subr.mxu0 0.0
        %1215 = vmatpush1.xpose.msra.mxu0 0.0
        %1216 = vmatprep.subr.mxu0 0.0
        %1217 = vmatpush1.xpose.msra.mxu0 0.0
        %1218 = vmatprep.subr.mxu0 0.0
        %1219 = vmatpush1.xpose.msra.mxu0 0.0
        %1220 = vmatprep.subr.mxu0 0.0
        %1221 = vmatpush1.xpose.msra.mxu0 0.0
        %1222 = vmatprep.subr.mxu0 0.0
        %1223 = vmatpush1.xpose.msra.mxu0 0.0
        %1224 = vmatprep.subr.mxu0 0.0
        %1225 = vmatpush1.xpose.msra.mxu0 0.0
        %1226 = vmatprep.subr.mxu0 0.0
        %1227 = vmatpush1.xpose.msra.mxu0 0.0
        %1228 = vmatprep.subr.mxu0 0.0
        %1229 = vmatpush1.xpose.msra.mxu0 0.0
        %1230 = vmatprep.subr.mxu0 0.0
        %1231 = vmatpush1.xpose.msra.mxu0 0.0
        %1232 = vmatprep.subr.mxu0 0.0
        %1233 = vmatpush1.xpose.msra.mxu0 0.0
        %1234 = vmatprep.subr.mxu0 0.0
        %1235 = vmatpush1.xpose.msra.mxu0 0.0
        %1236 = vmatprep.subr.mxu0 0.0
        %1237 = vmatpush1.xpose.msra.mxu0 0.0
        %1238 = vmatprep.subr.mxu0 0.0
        %1239 = vmatpush1.xpose.msra.mxu0 0.0
        %1240 = vmatprep.subr.mxu0 0.0
        %1241 = vmatpush1.xpose.msra.mxu0 0.0
        %1242 = vmatprep.subr.mxu0 0.0
        %1243 = vmatpush1.xpose.msra.mxu0 0.0
        %1244 = vmatprep.subr.mxu0 0.0
        %1245 = vmatpush1.xpose.msra.mxu0 0.0
        %1246 = vmatprep.mubr.f32.mxu0 0.0
        %1247 = vmatmul.mubr.f32.gmra.mrb[0].mxu0 %v1178
        %v1248 = vpop.f32.mrb[0].mxu0
        %v1249 = vadd.f32 0.0, %v1248
        %v1250 = vpop.f32.mrb[0].mxu0
        %1251 = vdwg.mxu0
        %v1252 = vsel %vm340, %v1249, -inf
        %1253 = vmax.xlane.f32.xlu0 %v1252
        %v1254 = vpop.xlane.xlu0 %1253
        %v1255 = vsub.f32 %v1249, %v1254
        %v1256 = vmul.f32 %v1255, 1.442695
        %v1257 = vpow.pop %v1256
        %v1258 = vsel %vm340, %v1257, 0.0
        %1259 = vadd.xlane.f32.xlu0 %v1258
        %v1260 = vpop.xlane.xlu0 %1259
        %v1261 = vrcp.pop %v1260
        %v1262 = vmul.f32 %v1260, %v1261
        %v1263 = vsub.f32 2.0, %v1262
        %v1264 = vmul.f32 %v1261, %v1263
        %v1265 = vmul.f32 %v1257, %v1264
        %1266 = vrot.lane.b32.xlu0 %v1004, 88
        %v1267 = vpop.permute.xlu0 %1266
        %v1270 = vsel %vm340, %v1265, 0
        %1272 = vmatprep.subr.mxu0 0.0
        %1273 = vmatpush1.msra.mxu0 %v1267
        %1274 = vmatprep.subr.mxu0 0.0
        %1275 = vmatpush1.msra.mxu0 0.0
        %1276 = vmatprep.subr.mxu0 0.0
        %1277 = vmatpush1.msra.mxu0 0.0
        %1278 = vmatprep.subr.mxu0 0.0
        %1279 = vmatpush1.msra.mxu0 0.0
        %1280 = vmatprep.subr.mxu0 0.0
        %1281 = vmatpush1.msra.mxu0 0.0
        %1282 = vmatprep.subr.mxu0 0.0
        %1283 = vmatpush1.msra.mxu0 0.0
        %1284 = vmatprep.subr.mxu0 0.0
        %1285 = vmatpush1.msra.mxu0 0.0
        %1286 = vmatprep.subr.mxu0 0.0
        %1287 = vmatpush1.msra.mxu0 0.0
        %1288 = vmatprep.subr.mxu0 0.0
        %1289 = vmatpush1.msra.mxu0 0.0
        %1290 = vmatprep.subr.mxu0 0.0
        %1291 = vmatpush1.msra.mxu0 0.0
        %1292 = vmatprep.subr.mxu0 0.0
        %1293 = vmatpush1.msra.mxu0 0.0
        %1294 = vmatprep.subr.mxu0 0.0
        %1295 = vmatpush1.msra.mxu0 0.0
        %1296 = vmatprep.subr.mxu0 0.0
        %1297 = vmatpush1.msra.mxu0 0.0
        %1298 = vmatprep.subr.mxu0 0.0
        %1299 = vmatpush1.msra.mxu0 0.0
        %1300 = vmatprep.subr.mxu0 0.0
        %1301 = vmatpush1.msra.mxu0 0.0
        %1302 = vmatprep.subr.mxu0 0.0
        %1303 = vmatpush1.msra.mxu0 0.0
        %1304 = vmatprep.subr.mxu0 0.0
        %1305 = vmatpush1.msra.mxu0 0.0
        %1306 = vmatprep.subr.mxu0 0.0
        %1307 = vmatpush1.msra.mxu0 0.0
        %1308 = vmatprep.subr.mxu0 0.0
        %1309 = vmatpush1.msra.mxu0 0.0
        %1310 = vmatprep.subr.mxu0 0.0
        %1311 = vmatpush1.msra.mxu0 0.0
        %1312 = vmatprep.subr.mxu0 0.0
        %1313 = vmatpush1.msra.mxu0 0.0
        %1314 = vmatprep.subr.mxu0 0.0
        %1315 = vmatpush1.msra.mxu0 0.0
        %1316 = vmatprep.subr.mxu0 0.0
        %1317 = vmatpush1.msra.mxu0 0.0
        %1318 = vmatprep.subr.mxu0 0.0
        %1319 = vmatpush1.msra.mxu0 0.0
        %1320 = vmatprep.subr.mxu0 0.0
        %1321 = vmatpush1.msra.mxu0 0.0
        %1322 = vmatprep.subr.mxu0 0.0
        %1323 = vmatpush1.msra.mxu0 0.0
        %1324 = vmatprep.subr.mxu0 0.0
        %1325 = vmatpush1.msra.mxu0 0.0
        %1326 = vmatprep.subr.mxu0 0.0
        %1327 = vmatpush1.msra.mxu0 0.0
        %1328 = vmatprep.subr.mxu0 0.0
        %1329 = vmatpush1.msra.mxu0 0.0
        %1330 = vmatprep.subr.mxu0 0.0
        %1331 = vmatpush1.msra.mxu0 0.0
        %1332 = vmatprep.subr.mxu0 0.0
        %1333 = vmatpush1.msra.mxu0 0.0
        %1334 = vmatprep.subr.mxu0 0.0
        %1335 = vmatpush1.msra.mxu0 0.0
        %1336 = vmatprep.mubr.f32.mxu0 0.0
        %1337 = vmatmul.mubr.f32.gmra.mrb[0].mxu0 %v1270
        %v1338 = vpop.f32.mrb[0].mxu0
        %v1339 = vadd.f32 0.0, %v1338
        %v1340 = vpop.f32.mrb[0].mxu0
        %1341 = vdwg.mxu0
        %1343 = vrot.lane.b32.xlu0 %v1339, 8
        %v1344 = vpop.permute.xlu0 %1343
        %v1346 = vsel %vm340, %v1171, %v1344
        %v1348 = vsel %vm678, %v1346, 0
        %1350 = vmatprep.subr.mxu0 0.0
        %1351 = vmatpush1.msra.mxu0 %v899
        %1352 = vmatprep.subr.mxu0 0.0
        %1353 = vmatpush1.msra.mxu0 %v900
        %1354 = vmatprep.subr.mxu0 0.0
        %1355 = vmatpush1.msra.mxu0 0.0
        %1356 = vmatprep.subr.mxu0 0.0
        %1357 = vmatpush1.msra.mxu0 0.0
        %1358 = vmatprep.subr.mxu0 0.0
        %1359 = vmatpush1.msra.mxu0 0.0
        %1360 = vmatprep.subr.mxu0 0.0
        %1361 = vmatpush1.msra.mxu0 0.0
        %1362 = vmatprep.subr.mxu0 0.0
        %1363 = vmatpush1.msra.mxu0 0.0
        %1364 = vmatprep.subr.mxu0 0.0
        %1365 = vmatpush1.msra.mxu0 0.0
        %1366 = vmatprep.subr.mxu0 0.0
        %1367 = vmatpush1.msra.mxu0 0.0
        %1368 = vmatprep.subr.mxu0 0.0
        %1369 = vmatpush1.msra.mxu0 0.0
        %1370 = vmatprep.subr.mxu0 0.0
        %1371 = vmatpush1.msra.mxu0 0.0
        %1372 = vmatprep.subr.mxu0 0.0
        %1373 = vmatpush1.msra.mxu0 0.0
        %1374 = vmatprep.subr.mxu0 0.0
        %1375 = vmatpush1.msra.mxu0 0.0
        %1376 = vmatprep.subr.mxu0 0.0
        %1377 = vmatpush1.msra.mxu0 0.0
        %1378 = vmatprep.subr.mxu0 0.0
        %1379 = vmatpush1.msra.mxu0 0.0
        %1380 = vmatprep.subr.mxu0 0.0
        %1381 = vmatpush1.msra.mxu0 0.0
        %1382 = vmatprep.subr.mxu0 0.0
        %1383 = vmatpush1.msra.mxu0 0.0
        %1384 = vmatprep.subr.mxu0 0.0
        %1385 = vmatpush1.msra.mxu0 0.0
        %1386 = vmatprep.subr.mxu0 0.0
        %1387 = vmatpush1.msra.mxu0 0.0
        %1388 = vmatprep.subr.mxu0 0.0
        %1389 = vmatpush1.msra.mxu0 0.0
        %1390 = vmatprep.subr.mxu0 0.0
        %1391 = vmatpush1.msra.mxu0 0.0
        %1392 = vmatprep.subr.mxu0 0.0
        %1393 = vmatpush1.msra.mxu0 0.0
        %1394 = vmatprep.subr.mxu0 0.0
        %1395 = vmatpush1.msra.mxu0 0.0
        %1396 = vmatprep.subr.mxu0 0.0
        %1397 = vmatpush1.msra.mxu0 0.0
        %1398 = vmatprep.subr.mxu0 0.0
        %1399 = vmatpush1.msra.mxu0 0.0
        %1400 = vmatprep.subr.mxu0 0.0
        %1401 = vmatpush1.msra.mxu0 0.0
        %1402 = vmatprep.subr.mxu0 0.0
        %1403 = vmatpush1.msra.mxu0 0.0
        %1404 = vmatprep.subr.mxu0 0.0
        %1405 = vmatpush1.msra.mxu0 0.0
        %1406 = vmatprep.subr.mxu0 0.0
        %1407 = vmatpush1.msra.mxu0 0.0
        %1408 = vmatprep.subr.mxu0 0.0
        %1409 = vmatpush1.msra.mxu0 0.0
        %1410 = vmatprep.subr.mxu0 0.0
        %1411 = vmatpush1.msra.mxu0 0.0
        %1412 = vmatprep.subr.mxu0 0.0
        %1413 = vmatpush1.msra.mxu0 0.0
        %1414 = vmatprep.mubr.f32.mxu0 0.0
        %1415 = vmatmul.mubr.f32.gmra.mrb[0].mxu0 %v1348
        %v1416 = vpop.f32.mrb[0].mxu0
        %v1417 = vadd.f32 0.0, %v1416
        %v1418 = vpop.f32.mrb[0].mxu0
        %1419 = vdwg.mxu0
        %v1420 = vadd.f32 %v887, %v1417
        %v1421 = vlaneseq
        %v1422 = vshrl.u32 %v1421, 7
        %v1423 = vsub.s32 0, %v1422
        %v1424 = vrot.slane %v891, %v1423
        %v1425 = vadd.f32 %v1420, %v1424
        %v1426 = vsel %vm233, %v1425, 0.0
        %1427 = vadd.xlane.f32.xlu0 %v1426
        %v1428 = vpop.xlane.xlu0 %1427
        %v1429 = vmul.f32 %v1428, %v237
        %v1430 = vmul.f32 %v1425, %v1425
        %v1431 = vsel %vm233, %v1430, 0.0
        %1432 = vadd.xlane.f32.xlu0 %v1431
        %v1433 = vpop.xlane.xlu0 %1432
        %v1434 = vmul.f32 %v1433, %v237
        %v1435 = vmul.f32 %v1429, %v1429
        %v1436 = vsub.f32 %v1434, %v1435
        %v1437 = vsub.f32 %v1425, %v1429
        %v1438 = vadd.f32 %v1436, 1e-05
        %v1439 = vrsqrt.pop %v1438
        %v1440 = vmul.f32 %v1437, %v1439
        %v1441 = vlaneseq
        %v1442 = vshrl.u32 %v1441, 7
        %v1443 = vsub.s32 0, %v1442
        %v1444 = vrot.slane %v892, %v1443
        %v1445 = vmul.f32 %v1440, %v1444
        %v1446 = vlaneseq
        %v1447 = vshrl.u32 %v1446, 7
        %v1448 = vsub.s32 0, %v1447
        %v1449 = vrot.slane %v893, %v1448
        %v1450 = vadd.f32 %v1445, %v1449
        %v1451 = vlaneseq
        %v1452 = vshrl.u32 %v1451, 7
        %v1453 = vsub.s32 0, %v1452
        %v1454 = vrot.slane %v894, %v1453
        %v1456 = vsel %vm233, %v1450, 0
        %1458 = vmatprep.subr.mxu0 0.0
        %1459 = vmatpush1.msra.mxu0 %v901
        %1460 = vmatprep.subr.mxu0 0.0
        %1461 = vmatpush1.msra.mxu0 %v902
        %1462 = vmatprep.subr.mxu0 0.0
        %1463 = vmatpush1.msra.mxu0 %v903
        %1464 = vmatprep.subr.mxu0 0.0
        %1465 = vmatpush1.msra.mxu0 %v904
        %1466 = vmatprep.subr.mxu0 0.0
        %1467 = vmatpush1.msra.mxu0 0.0
        %1468 = vmatprep.subr.mxu0 0.0
        %1469 = vmatpush1.msra.mxu0 0.0
        %1470 = vmatprep.subr.mxu0 0.0
        %1471 = vmatpush1.msra.mxu0 0.0
        %1472 = vmatprep.subr.mxu0 0.0
        %1473 = vmatpush1.msra.mxu0 0.0
        %1474 = vmatprep.subr.mxu0 0.0
        %1475 = vmatpush1.msra.mxu0 0.0
        %1476 = vmatprep.subr.mxu0 0.0
        %1477 = vmatpush1.msra.mxu0 0.0
        %1478 = vmatprep.subr.mxu0 0.0
        %1479 = vmatpush1.msra.mxu0 0.0
        %1480 = vmatprep.subr.mxu0 0.0
        %1481 = vmatpush1.msra.mxu0 0.0
        %1482 = vmatprep.subr.mxu0 0.0
        %1483 = vmatpush1.msra.mxu0 0.0
        %1484 = vmatprep.subr.mxu0 0.0
        %1485 = vmatpush1.msra.mxu0 0.0
        %1486 = vmatprep.subr.mxu0 0.0
        %1487 = vmatpush1.msra.mxu0 0.0
        %1488 = vmatprep.subr.mxu0 0.0
        %1489 = vmatpush1.msra.mxu0 0.0
        %1490 = vmatprep.subr.mxu0 0.0
        %1491 = vmatpush1.msra.mxu0 0.0
        %1492 = vmatprep.subr.mxu0 0.0
        %1493 = vmatpush1.msra.mxu0 0.0
        %1494 = vmatprep.subr.mxu0 0.0
        %1495 = vmatpush1.msra.mxu0 0.0
        %1496 = vmatprep.subr.mxu0 0.0
        %1497 = vmatpush1.msra.mxu0 0.0
        %1498 = vmatprep.subr.mxu0 0.0
        %1499 = vmatpush1.msra.mxu0 0.0
        %1500 = vmatprep.subr.mxu0 0.0
        %1501 = vmatpush1.msra.mxu0 0.0
        %1502 = vmatprep.subr.mxu0 0.0
        %1503 = vmatpush1.msra.mxu0 0.0
        %1504 = vmatprep.subr.mxu0 0.0
        %1505 = vmatpush1.msra.mxu0 0.0
        %1506 = vmatprep.subr.mxu0 0.0
        %1507 = vmatpush1.msra.mxu0 0.0
        %1508 = vmatprep.subr.mxu0 0.0
        %1509 = vmatpush1.msra.mxu0 0.0
        %1510 = vmatprep.subr.mxu0 0.0
        %1511 = vmatpush1.msra.mxu0 0.0
        %1512 = vmatprep.subr.mxu0 0.0
        %1513 = vmatpush1.msra.mxu0 0.0
        %1514 = vmatprep.subr.mxu0 0.0
        %1515 = vmatpush1.msra.mxu0 0.0
        %1516 = vmatprep.subr.mxu0 0.0
        %1517 = vmatpush1.msra.mxu0 0.0
        %1518 = vmatprep.subr.mxu0 0.0
        %1519 = vmatpush1.msra.mxu0 0.0
        %1520 = vmatprep.subr.mxu0 0.0
        %1521 = vmatpush1.msra.mxu0 0.0
        %1522 = vmatprep.mubr.f32.mxu0 0.0
        %1523 = vmatmul.mubr.f32.gmra.mrb[0].mxu0 %v1456
        %v1524 = vpop.f32.mrb[0].mxu0
        %v1525 = vadd.f32 %v1454, %v1524
        %v1526 = vpop.f32.mrb[0].mxu0
        %1527 = vdwg.mxu0
        %v1528 = vmul.f32 %v1525, 0.5
        %v1529 = vmul.f32 %v1525, 0.70710677
        %vm1530 = vcmp.ge.f32.partialorder %v1529, 0.0
        %v1531 = vsel %vm1530, 1.0, -1.0
        %v1532 = vand.u32 2147483647, %v1529
        %v1533 = vmul.f32 %v1532, 0.3275911
        %v1534 = vadd.f32 %v1533, 1.0
        %v1535 = vrcp.pop %v1534
        %v1536 = vmul.f32 1.0, %v1535
        %v1537 = vmul.f32 %v1536, 1.0614054
        %v1538 = vadd.f32 %v1537, -1.4531521
        %v1539 = vmul.f32 %v1538, %v1536
        %v1540 = vadd.f32 %v1539, 1.4214138
        %v1541 = vmul.f32 %v1540, %v1536
        %v1542 = vadd.f32 %v1541, -0.28449672
        %v1543 = vmul.f32 %v1542, %v1536
        %v1544 = vadd.f32 %v1543, 0.2548296
        %v1545 = vmul.f32 %v1544, %v1536
        %v1546 = vsub.f32 0.0, %v1532
        %v1547 = vmul.f32 %v1546, %v1532
        %v1548 = vmul.f32 %v1547, 1.442695
        %v1549 = vpow.pop %v1548
        %v1550 = vmul.f32 %v1545, %v1549
        %v1551 = vsub.f32 1.0, %v1550
        %v1552 = vmul.f32 %v1531, %v1551
        %v1553 = vadd.f32 %v1552, 1.0
        %v1554 = vmul.f32 %v1528, %v1553
        %v1555 = vld [vmem:[#allocation7 + $0x58] sm:$0xff]
        %v1556 = vld [vmem:[#allocation7 + $0x60] sm:$0xff]
        %v1557 = vld [vmem:[#allocation7 + $0x68] sm:$0xff]
        %v1558 = vld [vmem:[#allocation7 + $0x70] sm:$0xff]
        %v1560 = vsel %vm233, %v1425, 0
        %1562 = vmatprep.subr.mxu0 0.0
        %1563 = vmatpush1.msra.mxu0 %v1555
        %1564 = vmatprep.subr.mxu0 0.0
        %1565 = vmatpush1.msra.mxu0 %v1556
        %1566 = vmatprep.subr.mxu0 0.0
        %1567 = vmatpush1.msra.mxu0 %v1557
        %1568 = vmatprep.subr.mxu0 0.0
        %1569 = vmatpush1.msra.mxu0 %v1558
        %1570 = vmatprep.subr.mxu0 0.0
        %1571 = vmatpush1.msra.mxu0 0.0
        %1572 = vmatprep.subr.mxu0 0.0
        %1573 = vmatpush1.msra.mxu0 0.0
        %1574 = vmatprep.subr.mxu0 0.0
        %1575 = vmatpush1.msra.mxu0 0.0
        %1576 = vmatprep.subr.mxu0 0.0
        %1577 = vmatpush1.msra.mxu0 0.0
        %1578 = vmatprep.subr.mxu0 0.0
        %1579 = vmatpush1.msra.mxu0 0.0
        %1580 = vmatprep.subr.mxu0 0.0
        %1581 = vmatpush1.msra.mxu0 0.0
        %1582 = vmatprep.subr.mxu0 0.0
        %1583 = vmatpush1.msra.mxu0 0.0
        %1584 = vmatprep.subr.mxu0 0.0
        %1585 = vmatpush1.msra.mxu0 0.0
        %1586 = vmatprep.subr.mxu0 0.0
        %1587 = vmatpush1.msra.mxu0 0.0
        %1588 = vmatprep.subr.mxu0 0.0
        %1589 = vmatpush1.msra.mxu0 0.0
        %1590 = vmatprep.subr.mxu0 0.0
        %1591 = vmatpush1.msra.mxu0 0.0
        %1592 = vmatprep.subr.mxu0 0.0
        %1593 = vmatpush1.msra.mxu0 0.0
        %1594 = vmatprep.subr.mxu0 0.0
        %1595 = vmatpush1.msra.mxu0 0.0
        %1596 = vmatprep.subr.mxu0 0.0
        %1597 = vmatpush1.msra.mxu0 0.0
        %1598 = vmatprep.subr.mxu0 0.0
        %1599 = vmatpush1.msra.mxu0 0.0
        %1600 = vmatprep.subr.mxu0 0.0
        %1601 = vmatpush1.msra.mxu0 0.0
        %1602 = vmatprep.subr.mxu0 0.0
        %1603 = vmatpush1.msra.mxu0 0.0
        %1604 = vmatprep.subr.mxu0 0.0
        %1605 = vmatpush1.msra.mxu0 0.0
        %1606 = vmatprep.subr.mxu0 0.0
        %1607 = vmatpush1.msra.mxu0 0.0
        %1608 = vmatprep.subr.mxu0 0.0
        %1609 = vmatpush1.msra.mxu0 0.0
        %1610 = vmatprep.subr.mxu0 0.0
        %1611 = vmatpush1.msra.mxu0 0.0
        %1612 = vmatprep.subr.mxu0 0.0
        %1613 = vmatpush1.msra.mxu0 0.0
        %1614 = vmatprep.subr.mxu0 0.0
        %1615 = vmatpush1.msra.mxu0 0.0
        %1616 = vmatprep.subr.mxu0 0.0
        %1617 = vmatpush1.msra.mxu0 0.0
        %1618 = vmatprep.subr.mxu0 0.0
        %1619 = vmatpush1.msra.mxu0 0.0
        %1620 = vmatprep.subr.mxu0 0.0
        %1621 = vmatpush1.msra.mxu0 0.0
        %1622 = vmatprep.subr.mxu0 0.0
        %1623 = vmatpush1.msra.mxu0 0.0
        %1624 = vmatprep.subr.mxu0 0.0
        %1625 = vmatpush1.msra.mxu0 0.0
        %1626 = vmatprep.mubr.f32.mxu0 0.0
        %1627 = vmatmul.mubr.f32.gmra.mrb[0].mxu0 %v1560
        %v1628 = vpop.f32.mrb[0].mxu0
        %v1629 = vadd.f32 0.0, %v1628
        %v1630 = vpop.f32.mrb[0].mxu0
        %1631 = vdwg.mxu0
        %v1632 = vadd.f32 %v1554, %v1629
        %1633 = vst.msk [vmem:[%s214] sm:$0xff] %vm678, %v1632
        %s1634 = sand.u32 %s97, 1
        %s1635 = scalar_lea.sflag [#allocation4], %s1634
        %s1636 = sand.u32 %s97, 1
        %s1637 = smul.addr %s1636, 8
        %s1638 = scalar_lea.vmem [#allocation8], %s1637
        // Predicated region
        $region45: #{tpu_custom_call.1} parent=31 // pred_check
          %p1639 = pneg %p107
        $region46: #{tpu_custom_call.1} parent=31 // pred_check_branch
          %1641 = sbr.rel (%p1639) target = $region48
        $region47: #{tpu_custom_call.1} parent=31 // pred_region
          %s1643 = ssub.s32 128, 128
          %1644 = vsyncadd %s1635, %s1643
          %s1645 = smul.addr %s21, 128
          %s1646 = scalar_lea.hbm %s3, %s1645
          %s1648 = sshll.u32 %s1638, 4
          %s1649 = int_to_ptr.vmem [resolvable:$true] %s1648
          %1651 = dma.vmem_to_hbm [thread:$0]  %s1649, 128, %s1646, %s1635
        $region48: #{tpu_custom_call.1} parent=31 // pred_fallthru
          _
      $region32: #{tpu_custom_call.1} parent=5 // pred_fallthru
        _
      %p1652 = scmp.le.s32.totalorder 2, %s16
      // Predicated region
      $region49: #{tpu_custom_call.1} parent=5 // pred_check
        %p1653 = pneg %p1652
      $region50: #{tpu_custom_call.1} parent=5 // pred_check_branch
        %1655 = sbr.rel (%p1653) target = $region52
      $region51: #{tpu_custom_call.1} parent=5 // pred_region
        %s1656 = ssub.s32 %s16, 2
        // Predicated region
        $region53: #{tpu_custom_call.1} parent=51 // pred_check
          %p1657 = pneg %p113
        $region54: #{tpu_custom_call.1} parent=51 // pred_check_branch
          %1659 = sbr.rel (%p1657) target = $region56
        $region55: #{tpu_custom_call.1} parent=51 // pred_region
          %s1660 = sand.u32 %s98, 1
          %s1661 = scalar_lea.sflag [#allocation4], %s1660
          %s1662 = sand.u32 %s98, 1
          %s1663 = smul.addr %s1662, 8
          %s1664 = scalar_lea.vmem [#allocation8], %s1663
          %1665 = dma.done %s1661, 128
        $region56: #{tpu_custom_call.1} parent=51 // pred_fallthru
          _
      $region52: #{tpu_custom_call.1} parent=5 // pred_fallthru
        _
    $region6: #{tpu_custom_call.1} parent=1 // loop_footer
      %s20 = sadd.s32 1, %s16
    $region7: #{tpu_custom_call.1} parent=1 // loop_footer_branch
      %15 = sbr.rel target = $region3
    $region8: #{tpu_custom_call.1} parent=1 // loop_exit
      _
    %1666 = vsyncpa [#allocation3], 1
    %s1667 = scalar_lea.sflag [#allocation3], 1
    %1668 = vsyncpa %s1667, 1
    %1669 = vsyncpa [#allocation6], 1
    %1670 = vsyncpa [#allocation4], 1
    %s1671 = scalar_lea.sflag [#allocation4], 1
    %1672 = vsyncpa %s1671, 1

</llo_original>
